<compile_context>
chip_gen: v7x
topology: tpu7x:2x2x1
jax: 0.10.0
libtpu: 0.0.40
codegen_flags: <defaults>
</compile_context>

<pallas_src>
import jax
import jax.numpy as jnp
from jax.experimental import pallas as pl
from jax.experimental.pallas import tpu as pltpu


def _gelu(x):
    # TODO(synk): PyTorch nn.GELU() defaults to the exact erf-GELU; the tanh approximation
    # is used here (tanh/exp lower to the EUP in Mosaic); max abs difference ~1e-3.
    return jax.nn.gelu(x, approximate=True)


def _moe_mlp_kernel(x_ref, g_ref, w1_ref, b1_ref, w2_ref, b2_ref, o_ref):
    """Fused 2-expert MLP + gated combine for one token tile.

    x_ref : (TM, Dm)      token tile
    g_ref : (TM, E)       per-token combine weights (0 for non-routed experts)
    w1_ref: (E, Dm, Dh)   fc1 weights (VMEM-resident across the grid)
    b1_ref: (E, Dh)       fc1 bias
    w2_ref: (E, Dh, Dm)   fc2 weights (VMEM-resident across the grid)
    b2_ref: (E, Dm)       fc2 bias
    o_ref : (TM, Dm)
    """
    num_expert = w1_ref.shape[0]
    x = x_ref[...]
    acc = jnp.zeros(o_ref.shape, jnp.float32)
    for e in range(num_expert):  # static unroll (num_expert == 2)
        # fc1 (MXU, f32 accumulation) + GELU (EUP)
        h = jnp.dot(x, w1_ref[e], preferred_element_type=jnp.float32)
        h = _gelu(h + b1_ref[e:e + 1, :].astype(jnp.float32))
        # fc2 (MXU, f32 accumulation)
        y = jnp.dot(h.astype(x.dtype), w2_ref[e],
                    preferred_element_type=jnp.float32)
        y = y + b2_ref[e:e + 1, :].astype(jnp.float32)
        # gated combine: lane-broadcast of the per-token weight column
        acc = acc + g_ref[:, e:e + 1].astype(jnp.float32) * y
    o_ref[...] = acc.astype(o_ref.dtype)


def moe_mlp_pallas(tokens, gates, w1, b1, w2, b2, *, block_tokens=256,
                   vmem_limit_bytes=32 * 1024 * 1024):
    """tokens: (T, Dm), gates: (T, E) dense combine weights. Returns (T, Dm)."""
    T, Dm = tokens.shape
    E, _, Dh = w1.shape
    assert gates.shape == (T, E)
    # Lane-dense feature dims; pad d_model/d_hidden in the caller if they are not
    # multiples of 128 (avoids masked vst partial stores).
    assert Dm % 128 == 0 and Dh % 128 == 0, "d_model/d_hidden must be multiples of 128"

    # Token tile: multiple of 8 sublanes, capped by the (padded) token count.
    tm = max(8, min(block_tokens, T))
    tm = (tm // 8) * 8
    t_pad = (-T) % tm
    if t_pad:
        tokens = jnp.pad(tokens, ((0, t_pad), (0, 0)))
        gates = jnp.pad(gates, ((0, t_pad), (0, 0)))  # zero gates -> zero padded rows
    Tp = T + t_pad
    grid = (Tp // tm,)

    out = pl.pallas_call(
        _moe_mlp_kernel,
        out_shape=jax.ShapeDtypeStruct((Tp, Dm), tokens.dtype),
        grid_spec=pltpu.PrefetchScalarGridSpec(
            num_scalar_prefetch=0,
            grid=grid,
            in_specs=[
                pl.BlockSpec((tm, Dm), lambda i: (i, 0)),        # token tile
                pl.BlockSpec((tm, E), lambda i: (i, 0)),         # combine weights
                pl.BlockSpec((E, Dm, Dh), lambda i: (0, 0, 0)),  # fc1 W (resident)
                pl.BlockSpec((E, Dh), lambda i: (0, 0)),         # fc1 b
                pl.BlockSpec((E, Dh, Dm), lambda i: (0, 0, 0)),  # fc2 W (resident)
                pl.BlockSpec((E, Dm), lambda i: (0, 0)),         # fc2 b
            ],
            out_specs=pl.BlockSpec((tm, Dm), lambda i: (i, 0)),
        ),
        compiler_params=pltpu.CompilerParams(
            dimension_semantics=("parallel",),
            vmem_limit_bytes=vmem_limit_bytes,
        ),
    )(tokens, gates, w1, b1, w2, b2)

    return out[:T] if t_pad else out


def naive_top1_gate(tokens, wg, bg):
    """fastmoe-style NaiveGate, top_k=1: dense (T, E) combine-weight matrix (one-hot)."""
    logits = tokens.astype(jnp.float32) @ wg.astype(jnp.float32) + bg.astype(jnp.float32)
    idx = jnp.argmax(logits, axis=-1)
    # softmax over the single selected score == 1.0 -> one-hot combine weights
    return jax.nn.one_hot(idx, logits.shape[-1], dtype=tokens.dtype)


def fmoe_mlp_forward(x, params, *, block_tokens=256):
    """PyTorchFMoE_MLP.forward: x (..., d_model) -> (..., d_model)."""
    d_model = params["w1"].shape[1]
    tokens = x.reshape(-1, d_model)
    gates = naive_top1_gate(tokens, params["wg"], params["bg"])
    y = moe_mlp_pallas(tokens, gates, params["w1"], params["b1"],
                       params["w2"], params["b2"], block_tokens=block_tokens)
    return y.reshape(x.shape)


def fmoe_mlp_reference(x, params):
    """Pure-JAX reference: dense per-expert MLPs + gated (top-1) combine."""
    d_model = params["w1"].shape[1]
    tokens = x.reshape(-1, d_model).astype(jnp.float32)
    gates = naive_top1_gate(tokens, params["wg"], params["bg"]).astype(jnp.float32)
    num_expert = params["w1"].shape[0]
    y = jnp.zeros_like(tokens)
    for e in range(num_expert):
        h = _gelu(tokens @ params["w1"][e].astype(jnp.float32)
                  + params["b1"][e].astype(jnp.float32))
        ye = h @ params["w2"][e].astype(jnp.float32) + params["b2"][e].astype(jnp.float32)
        y = y + gates[:, e:e + 1] * ye
    return y.reshape(x.shape).astype(x.dtype)


if __name__ == "__main__":
    # Small shapes implied by the module: x (B, N, d_model); 2 experts, top_k=1.
    B, N = 2, 64
    d_model, d_hidden, num_expert = 128, 256, 2

    key = jax.random.PRNGKey(0)
    kx, kg, kw1, kb1, kw2, kb2 = jax.random.split(key, 6)

    x = jax.random.normal(kx, (B, N, d_model), dtype=jnp.float32)

    params = {
        # gate (NaiveGate linear), trunc_normal(std=0.02)-like init
        "wg": 0.02 * jax.random.normal(kg, (d_model, num_expert), jnp.float32),
        "bg": jnp.zeros((num_expert,), jnp.float32),
        # expert 0 = Mlp, expert 1 = Shift_Mlp (dense stand-in; see TODO above)
        "w1": 0.02 * jax.random.normal(kw1, (num_expert, d_model, d_hidden), jnp.float32),
        "b1": 0.02 * jax.random.normal(kb1, (num_expert, d_hidden), jnp.float32),
        "w2": 0.02 * jax.random.normal(kw2, (num_expert, d_hidden, d_model), jnp.float32),
        "b2": 0.02 * jax.random.normal(kb2, (num_expert, d_model), jnp.float32),
    }

    # block_tokens=64 -> 2 parallel token tiles (keeps both v7x TensorCores busy).
    out = fmoe_mlp_forward(x, params, block_tokens=64)
    out = jax.block_until_ready(out)

    ref = fmoe_mlp_reference(x, params)
    assert out.shape == x.shape
    assert jnp.allclose(out, ref, atol=1e-3, rtol=1e-3), float(jnp.max(jnp.abs(out - ref)))

    print("KERNEL_OK")
</pallas_src>

<mosaic_0001>
module attributes {stable_mosaic.version = 11 : i64} {
  func.func @_moe_mlp_kernel(%arg0: i32, %arg1: memref<64x128xf32, #tpu.memory_space<vmem>>, %arg2: memref<64x2xf32, #tpu.memory_space<vmem>>, %arg3: memref<2x128x256xf32, #tpu.memory_space<vmem>>, %arg4: memref<2x256xf32, #tpu.memory_space<vmem>>, %arg5: memref<2x256x128xf32, #tpu.memory_space<vmem>>, %arg6: memref<2x128xf32, #tpu.memory_space<vmem>>, %arg7: memref<64x128xf32, #tpu.memory_space<vmem>>) attributes {dimension_semantics = [#tpu.dimension_semantics<parallel>], iteration_bounds = array<i64: 2>, scalar_prefetch = 0 : i64, scratch_operands = 0 : i64, tpu.core_type = #tpu.core_type<tc>, window_params = [{transform_indices = @transform_0, window_bounds = array<i64: 64, 128>}, {transform_indices = @transform_1, window_bounds = array<i64: 64, 2>}, {pipeline_mode = #tpu.pipeline_mode<synchronous>, transform_indices = @transform_2, window_bounds = array<i64: 2, 128, 256>}, {pipeline_mode = #tpu.pipeline_mode<synchronous>, transform_indices = @transform_3, window_bounds = array<i64: 2, 256>}, {pipeline_mode = #tpu.pipeline_mode<synchronous>, transform_indices = @transform_4, window_bounds = array<i64: 2, 256, 128>}, {pipeline_mode = #tpu.pipeline_mode<synchronous>, transform_indices = @transform_5, window_bounds = array<i64: 2, 128>}, {transform_indices = @transform_6, window_bounds = array<i64: 64, 128>}]} {
    %c0 = arith.constant 0 : index
    %c0_0 = arith.constant 0 : index
    %0 = vector.load %arg1[%c0, %c0_0] : memref<64x128xf32, #tpu.memory_space<vmem>>, vector<64x128xf32>
    %cst = arith.constant 0.000000e+00 : f32
    %1 = vector.broadcast %cst : f32 to vector<64x128xf32>
    %c0_1 = arith.constant 0 : index
    %c0_2 = arith.constant 0 : index
    %c0_3 = arith.constant 0 : index
    %2 = vector.load %arg3[%c0_1, %c0_2, %c0_3] : memref<2x128x256xf32, #tpu.memory_space<vmem>>, vector<1x128x256xf32>
    %3 = vector.shape_cast %2 : vector<1x128x256xf32> to vector<128x256xf32>
    %cst_4 = arith.constant dense<0.000000e+00> : vector<64x256xf32>
    %4 = tpu.matmul %0, %3, %cst_4 {dimension_numbers = #tpu.dot_dimension_numbers<[1], [0], [0], [1], [0, 0, 1, 1], [], []>} : vector<64x128xf32>, vector<128x256xf32>, vector<64x256xf32> -> vector<64x256xf32>
    %c0_5 = arith.constant 0 : index
    %c0_6 = arith.constant 0 : index
    %5 = vector.load %arg4[%c0_5, %c0_6] : memref<2x256xf32, #tpu.memory_space<vmem>>, vector<1x256xf32>
    %6 = vector.broadcast %5 : vector<1x256xf32> to vector<64x256xf32>
    %7 = arith.addf %4, %6 : vector<64x256xf32>
    %8 = arith.mulf %7, %7 : vector<64x256xf32>
    %9 = arith.mulf %7, %8 : vector<64x256xf32>
    %cst_7 = arith.constant 4.471500e-02 : f32
    %10 = vector.broadcast %cst_7 : f32 to vector<64x256xf32>
    %11 = arith.mulf %10, %9 : vector<64x256xf32>
    %12 = arith.addf %7, %11 : vector<64x256xf32>
    %cst_8 = arith.constant 0.797884583 : f32
    %13 = vector.broadcast %cst_8 : f32 to vector<64x256xf32>
    %14 = arith.mulf %13, %12 : vector<64x256xf32>
    %15 = math.tanh %14 : vector<64x256xf32>
    %cst_9 = arith.constant 1.000000e+00 : f32
    %16 = vector.broadcast %cst_9 : f32 to vector<64x256xf32>
    %17 = arith.addf %16, %15 : vector<64x256xf32>
    %cst_10 = arith.constant 5.000000e-01 : f32
    %18 = vector.broadcast %cst_10 : f32 to vector<64x256xf32>
    %19 = arith.mulf %18, %17 : vector<64x256xf32>
    %20 = arith.mulf %7, %19 : vector<64x256xf32>
    %c0_11 = arith.constant 0 : index
    %c0_12 = arith.constant 0 : index
    %c0_13 = arith.constant 0 : index
    %21 = vector.load %arg5[%c0_11, %c0_12, %c0_13] : memref<2x256x128xf32, #tpu.memory_space<vmem>>, vector<1x256x128xf32>
    %22 = vector.shape_cast %21 : vector<1x256x128xf32> to vector<256x128xf32>
    %cst_14 = arith.constant dense<0.000000e+00> : vector<64x128xf32>
    %23 = tpu.matmul %20, %22, %cst_14 {dimension_numbers = #tpu.dot_dimension_numbers<[1], [0], [0], [1], [0, 0, 1, 1], [], []>} : vector<64x256xf32>, vector<256x128xf32>, vector<64x128xf32> -> vector<64x128xf32>
    %c0_15 = arith.constant 0 : index
    %c0_16 = arith.constant 0 : index
    %24 = vector.load %arg6[%c0_15, %c0_16] : memref<2x128xf32, #tpu.memory_space<vmem>>, vector<1x128xf32>
    %25 = vector.broadcast %24 : vector<1x128xf32> to vector<64x128xf32>
    %26 = arith.addf %23, %25 : vector<64x128xf32>
    %c0_17 = arith.constant 0 : index
    %c0_18 = arith.constant 0 : index
    %27 = vector.load %arg2[%c0_17, %c0_18] : memref<64x2xf32, #tpu.memory_space<vmem>>, vector<64x1xf32>
    %28 = vector.broadcast %27 : vector<64x1xf32> to vector<64x128xf32>
    %29 = arith.mulf %28, %26 : vector<64x128xf32>
    %30 = arith.addf %1, %29 : vector<64x128xf32>
    %c1 = arith.constant 1 : index
    %c0_19 = arith.constant 0 : index
    %c0_20 = arith.constant 0 : index
    %31 = vector.load %arg3[%c1, %c0_19, %c0_20] : memref<2x128x256xf32, #tpu.memory_space<vmem>>, vector<1x128x256xf32>
    %32 = vector.shape_cast %31 : vector<1x128x256xf32> to vector<128x256xf32>
    %cst_21 = arith.constant dense<0.000000e+00> : vector<64x256xf32>
    %33 = tpu.matmul %0, %32, %cst_21 {dimension_numbers = #tpu.dot_dimension_numbers<[1], [0], [0], [1], [0, 0, 1, 1], [], []>} : vector<64x128xf32>, vector<128x256xf32>, vector<64x256xf32> -> vector<64x256xf32>
    %c1_22 = arith.constant 1 : index
    %c0_23 = arith.constant 0 : index
    %34 = vector.load %arg4[%c1_22, %c0_23] : memref<2x256xf32, #tpu.memory_space<vmem>>, vector<1x256xf32>
    %35 = vector.broadcast %34 : vector<1x256xf32> to vector<64x256xf32>
    %36 = arith.addf %33, %35 : vector<64x256xf32>
    %37 = arith.mulf %36, %36 : vector<64x256xf32>
    %38 = arith.mulf %36, %37 : vector<64x256xf32>
    %cst_24 = arith.constant 4.471500e-02 : f32
    %39 = vector.broadcast %cst_24 : f32 to vector<64x256xf32>
    %40 = arith.mulf %39, %38 : vector<64x256xf32>
    %41 = arith.addf %36, %40 : vector<64x256xf32>
    %cst_25 = arith.constant 0.797884583 : f32
    %42 = vector.broadcast %cst_25 : f32 to vector<64x256xf32>
    %43 = arith.mulf %42, %41 : vector<64x256xf32>
    %44 = math.tanh %43 : vector<64x256xf32>
    %cst_26 = arith.constant 1.000000e+00 : f32
    %45 = vector.broadcast %cst_26 : f32 to vector<64x256xf32>
    %46 = arith.addf %45, %44 : vector<64x256xf32>
    %cst_27 = arith.constant 5.000000e-01 : f32
    %47 = vector.broadcast %cst_27 : f32 to vector<64x256xf32>
    %48 = arith.mulf %47, %46 : vector<64x256xf32>
    %49 = arith.mulf %36, %48 : vector<64x256xf32>
    %c1_28 = arith.constant 1 : index
    %c0_29 = arith.constant 0 : index
    %c0_30 = arith.constant 0 : index
    %50 = vector.load %arg5[%c1_28, %c0_29, %c0_30] : memref<2x256x128xf32, #tpu.memory_space<vmem>>, vector<1x256x128xf32>
    %51 = vector.shape_cast %50 : vector<1x256x128xf32> to vector<256x128xf32>
    %cst_31 = arith.constant dense<0.000000e+00> : vector<64x128xf32>
    %52 = tpu.matmul %49, %51, %cst_31 {dimension_numbers = #tpu.dot_dimension_numbers<[1], [0], [0], [1], [0, 0, 1, 1], [], []>} : vector<64x256xf32>, vector<256x128xf32>, vector<64x128xf32> -> vector<64x128xf32>
    %c1_32 = arith.constant 1 : index
    %c0_33 = arith.constant 0 : index
    %53 = vector.load %arg6[%c1_32, %c0_33] : memref<2x128xf32, #tpu.memory_space<vmem>>, vector<1x128xf32>
    %54 = vector.broadcast %53 : vector<1x128xf32> to vector<64x128xf32>
    %55 = arith.addf %52, %54 : vector<64x128xf32>
    %c0_34 = arith.constant 0 : index
    %c1_35 = arith.constant 1 : index
    %56 = vector.load %arg2[%c0_34, %c1_35] : memref<64x2xf32, #tpu.memory_space<vmem>>, vector<64x1xf32>
    %57 = vector.broadcast %56 : vector<64x1xf32> to vector<64x128xf32>
    %58 = arith.mulf %57, %55 : vector<64x128xf32>
    %59 = arith.addf %30, %58 : vector<64x128xf32>
    %c0_36 = arith.constant 0 : index
    %c0_37 = arith.constant 0 : index
    %60 = vector.load %arg7[%c0_36, %c0_37] : memref<64x128xf32, #tpu.memory_space<vmem>>, vector<64x128xf32>
    tpu.vector_store %arg7[%c0_36, %c0_37], %59 {strides = array<i32>} : memref<64x128xf32, #tpu.memory_space<vmem>>, vector<64x128xf32>,
    return
  }
  func.func @transform_0(%arg0: i32) -> (i32, i32) {
    %c0_i32 = arith.constant 0 : i32
    %c0_i32_0 = arith.constant 0 : i32
    return %arg0, %c0_i32 : i32, i32
  }
  func.func @transform_1(%arg0: i32) -> (i32, i32) {
    %c0_i32 = arith.constant 0 : i32
    %c0_i32_0 = arith.constant 0 : i32
    return %arg0, %c0_i32 : i32, i32
  }
  func.func @transform_2(%arg0: i32) -> (i32, i32, i32) {
    %c0_i32 = arith.constant 0 : i32
    %c0_i32_0 = arith.constant 0 : i32
    %c0_i32_1 = arith.constant 0 : i32
    %c0_i32_2 = arith.constant 0 : i32
    return %c0_i32, %c0_i32_0, %c0_i32_1 : i32, i32, i32
  }
  func.func @transform_3(%arg0: i32) -> (i32, i32) {
    %c0_i32 = arith.constant 0 : i32
    %c0_i32_0 = arith.constant 0 : i32
    %c0_i32_1 = arith.constant 0 : i32
    return %c0_i32, %c0_i32_0 : i32, i32
  }
  func.func @transform_4(%arg0: i32) -> (i32, i32, i32) {
    %c0_i32 = arith.constant 0 : i32
    %c0_i32_0 = arith.constant 0 : i32
    %c0_i32_1 = arith.constant 0 : i32
    %c0_i32_2 = arith.constant 0 : i32
    return %c0_i32, %c0_i32_0, %c0_i32_1 : i32, i32, i32
  }
  func.func @transform_5(%arg0: i32) -> (i32, i32) {
    %c0_i32 = arith.constant 0 : i32
    %c0_i32_0 = arith.constant 0 : i32
    %c0_i32_1 = arith.constant 0 : i32
    return %c0_i32, %c0_i32_0 : i32, i32
  }
  func.func @transform_6(%arg0: i32) -> (i32, i32) {
    %c0_i32 = arith.constant 0 : i32
    %c0_i32_0 = arith.constant 0 : i32
    return %arg0, %c0_i32 : i32, i32
  }
}

</mosaic_0001>

<llo_original>
// kernel: tpu_custom_call.1
$region0: #{tpu_custom_call.1}
  #allocation0 [shape = 'u32[]', space=smem, size = 0x4, offset = 0x4, fixed_abs, tag = 'smem constant byte address 0x4 - core index']
  #allocation1 [shape = 'u32[144,128]{1,0:T(1,128)}', space=vmem, size = 0x12000, scoped, tag = 'internal scratch']
  %s0 = inlined_call_operand.vmem [shape: f32[128,128], index: 0, kind: input, shape index: {}]
  %s1 = inlined_call_operand.vmem [shape: f32[128,2], index: 1, kind: input, shape index: {}]
  %s2 = inlined_call_operand.hbm [shape: f32[2,128,256], index: 2, kind: input, shape index: {}]
  %s3 = inlined_call_operand.vmem [shape: f32[2,256], index: 3, kind: input, shape index: {}]
  %s4 = inlined_call_operand.hbm [shape: f32[2,256,128], index: 4, kind: input, shape index: {}]
  %s5 = inlined_call_operand.vmem [shape: f32[2,128], index: 5, kind: input, shape index: {}]
  %s6 = inlined_call_operand.hbm [shape: f32[128,128], index: 6, kind: output, shape index: {}]
  %s7 = sld [smem:[#allocation0]]
  $region65: #{tpu_custom_call.1} parent=0
    _
  %s9 = ssub.s32 1, %s7
  %s10 = scalar_select 0, %s9, %s7
  $region1: #{tpu_custom_call.1} parent=0
    #allocation2 [shape = 'u8[262144]{0}', space=vmem, size = 0x40000, scoped, tag = 'input window, operand 2, single buffered']
    #allocation3 [shape = 's32[2]{0}', space=sflag, size = 0x8, scoped, tag = 'scoped memory for tpu_custom_call.1']
    #allocation4 [shape = 's32[2]{0}', space=sflag, size = 0x8, scoped, tag = 'scoped memory for tpu_custom_call.1']
    #allocation5 [shape = 'u8[262144]{0}', space=vmem, size = 0x40000, scoped, tag = 'input window, operand 4, single buffered']
    #allocation6 [shape = 's32[1]{0}', space=sflag, size = 0x4, scoped, tag = 'scoped memory for tpu_custom_call.1']
    #allocation7 [shape = 'u8[65536]{0}', space=vmem, size = 0x10000, scoped, tag = 'output window, operand 0']
    %11 = vsyncpa [#allocation3], 0
    %12 = vsyncpa [#allocation6], 0
    %13 = vsyncpa [#allocation4], 0
    %s14 = scalar_lea.sflag [#allocation4], 1
    %15 = vsyncpa %s14, 0
    loop: start=0, step=1, limit=4
    $region2: #{tpu_custom_call.1} parent=1 // loop_pre_header
      _
    $region3: #{tpu_custom_call.1} parent=1 // loop_header
      %s17 = sphi 0, %s21
      %p18 = scmp.ge.s32.totalorder %s17, 4
      %s27 = sphi 0, %s29
      %s30 = sphi 0, %s27
      %s31 = sphi 0, %s30
      %s47 = sphi 0, %s31
      %s53 = sphi 0, %s55
      %s56 = sphi 0, %s53
      %s57 = sphi 0, %s56
      %s73 = sphi 0, %s57
      %s77 = sphi 0, %s77
      %s79 = sphi 0, %s77
      %s80 = sphi 0, %s79
      %s94 = sphi 0, %s80
      %s98 = sphi 0, %s98
      %s100 = sphi 0, %s98
      %s101 = sphi 0, %s100
      %s115 = sphi 0, %s101
      %s119 = sphi 0, %s119
      %s121 = sphi 0, %s119
      %s122 = sphi 0, %s121
      %s136 = sphi 0, %s122
      %s140 = sphi 0, %s140
      %s142 = sphi 0, %s140
      %s143 = sphi 0, %s142
      %s157 = sphi 0, %s143
      %s163 = sphi 0, %s165
      %s166 = sphi 0, %s163
      %s167 = sphi 0, %s166
      %s183 = sphi 0, %s167
    $region4: #{tpu_custom_call.1} parent=1 // loop_header_branch
      %20 = sbr.rel (%p18) target = $region8
    $region5: #{tpu_custom_call.1} parent=1 // loop_body
      %s22 = ssub.s32 %s17, 1
      %s23 = ssub.s32 %s17, 2
      %s24 = sadd.s32 %s17, 1
      %s25 = ssub.s32 %s17, %s24
      %p26 = scmp.eq.s32.totalorder %s25, 0
      %s28 = sadd.s32 %s27, 1
      %s29 = scalar_select %p26, %s27, %s28
      %p32 = pneg %p26
      %p33 = scmp.eq.s32.totalorder %s17, 1
      %p34 = por %p32, %p33
      %p35 = scmp.ne.s32.totalorder %s27, %s30
      %p36 = scmp.eq.s32.totalorder %s17, 0
      %p37 = por %p35, %p36
      %p38 = scmp.ne.s32.totalorder %s27, %s30
      %p39 = scmp.eq.s32.totalorder %s22, 1
      %p40 = por %p38, %p39
      %p41 = scmp.ne.s32.totalorder %s30, %s31
      %p42 = scmp.eq.s32.totalorder %s22, 0
      %p43 = por %p41, %p42
      %p44 = scmp.ne.s32.totalorder %s30, %s31
      %p45 = scmp.eq.s32.totalorder %s23, 1
      %p46 = por %p44, %p45
      %p48 = scmp.ne.s32.totalorder %s31, %s47
      %p49 = scmp.eq.s32.totalorder %s23, 0
      %p50 = por %p48, %p49
      %s51 = ssub.s32 %s17, %s24
      %p52 = scmp.eq.s32.totalorder %s51, 0
      %s54 = sadd.s32 %s53, 1
      %s55 = scalar_select %p52, %s53, %s54
      %p58 = pneg %p52
      %p59 = scmp.eq.s32.totalorder %s17, 1
      %p60 = por %p58, %p59
      %p61 = scmp.ne.s32.totalorder %s53, %s56
      %p62 = scmp.eq.s32.totalorder %s17, 0
      %p63 = por %p61, %p62
      %p64 = scmp.ne.s32.totalorder %s53, %s56
      %p65 = scmp.eq.s32.totalorder %s22, 1
      %p66 = por %p64, %p65
      %p67 = scmp.ne.s32.totalorder %s56, %s57
      %p68 = scmp.eq.s32.totalorder %s22, 0
      %p69 = por %p67, %p68
      %p70 = scmp.ne.s32.totalorder %s56, %s57
      %p71 = scmp.eq.s32.totalorder %s23, 1
      %p72 = por %p70, %p71
      %p74 = scmp.ne.s32.totalorder %s57, %s73
      %p75 = scmp.eq.s32.totalorder %s23, 0
      %p76 = por %p74, %p75
      %s78 = sadd.s32 %s77, 1
      %p81 = scmp.eq.s32.totalorder %s17, 1
      %p82 = scmp.ne.s32.totalorder %s77, %s79
      %p83 = scmp.eq.s32.totalorder %s17, 0
      %p84 = por %p82, %p83
      %p85 = scmp.ne.s32.totalorder %s77, %s79
      %p86 = scmp.eq.s32.totalorder %s22, 1
      %p87 = por %p85, %p86
      %p88 = scmp.ne.s32.totalorder %s79, %s80
      %p89 = scmp.eq.s32.totalorder %s22, 0
      %p90 = por %p88, %p89
      %p91 = scmp.ne.s32.totalorder %s79, %s80
      %p92 = scmp.eq.s32.totalorder %s23, 1
      %p93 = por %p91, %p92
      %p95 = scmp.ne.s32.totalorder %s80, %s94
      %p96 = scmp.eq.s32.totalorder %s23, 0
      %p97 = por %p95, %p96
      %s99 = sadd.s32 %s98, 1
      %p102 = scmp.eq.s32.totalorder %s17, 1
      %p103 = scmp.ne.s32.totalorder %s98, %s100
      %p104 = scmp.eq.s32.totalorder %s17, 0
      %p105 = por %p103, %p104
      %p106 = scmp.ne.s32.totalorder %s98, %s100
      %p107 = scmp.eq.s32.totalorder %s22, 1
      %p108 = por %p106, %p107
      %p109 = scmp.ne.s32.totalorder %s100, %s101
      %p110 = scmp.eq.s32.totalorder %s22, 0
      %p111 = por %p109, %p110
      %p112 = scmp.ne.s32.totalorder %s100, %s101
      %p113 = scmp.eq.s32.totalorder %s23, 1
      %p114 = por %p112, %p113
      %p116 = scmp.ne.s32.totalorder %s101, %s115
      %p117 = scmp.eq.s32.totalorder %s23, 0
      %p118 = por %p116, %p117
      %s120 = sadd.s32 %s119, 1
      %p123 = scmp.eq.s32.totalorder %s17, 1
      %p124 = scmp.ne.s32.totalorder %s119, %s121
      %p125 = scmp.eq.s32.totalorder %s17, 0
      %p126 = por %p124, %p125
      %p127 = scmp.ne.s32.totalorder %s119, %s121
      %p128 = scmp.eq.s32.totalorder %s22, 1
      %p129 = por %p127, %p128
      %p130 = scmp.ne.s32.totalorder %s121, %s122
      %p131 = scmp.eq.s32.totalorder %s22, 0
      %p132 = por %p130, %p131
      %p133 = scmp.ne.s32.totalorder %s121, %s122
      %p134 = scmp.eq.s32.totalorder %s23, 1
      %p135 = por %p133, %p134
      %p137 = scmp.ne.s32.totalorder %s122, %s136
      %p138 = scmp.eq.s32.totalorder %s23, 0
      %p139 = por %p137, %p138
      %s141 = sadd.s32 %s140, 1
      %p144 = scmp.eq.s32.totalorder %s17, 1
      %p145 = scmp.ne.s32.totalorder %s140, %s142
      %p146 = scmp.eq.s32.totalorder %s17, 0
      %p147 = por %p145, %p146
      %p148 = scmp.ne.s32.totalorder %s140, %s142
      %p149 = scmp.eq.s32.totalorder %s22, 1
      %p150 = por %p148, %p149
      %p151 = scmp.ne.s32.totalorder %s142, %s143
      %p152 = scmp.eq.s32.totalorder %s22, 0
      %p153 = por %p151, %p152
      %p154 = scmp.ne.s32.totalorder %s142, %s143
      %p155 = scmp.eq.s32.totalorder %s23, 1
      %p156 = por %p154, %p155
      %p158 = scmp.ne.s32.totalorder %s143, %s157
      %p159 = scmp.eq.s32.totalorder %s23, 0
      %p160 = por %p158, %p159
      %s161 = ssub.s32 %s17, %s24
      %p162 = scmp.eq.s32.totalorder %s161, 0
      %s164 = sadd.s32 %s163, 1
      %s165 = scalar_select %p162, %s163, %s164
      %p168 = pneg %p162
      %p169 = scmp.eq.s32.totalorder %s17, 1
      %p170 = por %p168, %p169
      %p171 = scmp.ne.s32.totalorder %s163, %s166
      %p172 = scmp.eq.s32.totalorder %s17, 0
      %p173 = por %p171, %p172
      %p174 = scmp.ne.s32.totalorder %s163, %s166
      %p175 = scmp.eq.s32.totalorder %s22, 1
      %p176 = por %p174, %p175
      %p177 = scmp.ne.s32.totalorder %s166, %s167
      %p178 = scmp.eq.s32.totalorder %s22, 0
      %p179 = por %p177, %p178
      %p180 = scmp.ne.s32.totalorder %s166, %s167
      %p181 = scmp.eq.s32.totalorder %s23, 1
      %p182 = por %p180, %p181
      %p184 = scmp.ne.s32.totalorder %s167, %s183
      %p185 = scmp.eq.s32.totalorder %s23, 0
      %p186 = por %p184, %p185
      %p187 = scmp.le.s32.totalorder 1, %s17
      %p188 = scmp.lt.s32.totalorder %s17, 3
      %p189 = pnand %p187, %p188
      %p190 = pneg %p189
      // Predicated region
      $region9: #{tpu_custom_call.1} parent=5 // pred_check
        _
      $region10: #{tpu_custom_call.1} parent=5 // pred_check_branch
        %192 = sbr.rel (%p189) target = $region12
      $region11: #{tpu_custom_call.1} parent=5 // pred_region
        %s193 = ssub.s32 %s17, 1
        // Predicated region
        $region13: #{tpu_custom_call.1} parent=11 // pred_check
          %p194 = pneg %p90
        $region14: #{tpu_custom_call.1} parent=11 // pred_check_branch
          %196 = sbr.rel (%p194) target = $region16
        $region15: #{tpu_custom_call.1} parent=11 // pred_region
          %s198 = ssub.s32 8192, 8192
          %199 = vsyncadd [#allocation3], %s198
          %s200 = sshll.u32 [#allocation2], 4
          %s201 = int_to_ptr.vmem [resolvable:$true] %s200
          %206 = dma.hbm_to_vmem [thread:$0]  %s2, 8192, %s201, [#allocation3], 256, 256, 16
        $region16: #{tpu_custom_call.1} parent=11 // pred_fallthru
          _
        // Predicated region
        $region17: #{tpu_custom_call.1} parent=11 // pred_check
          %p207 = pneg %p111
        $region18: #{tpu_custom_call.1} parent=11 // pred_check_branch
          %209 = sbr.rel (%p207) target = $region20
        $region19: #{tpu_custom_call.1} parent=11 // pred_region
          _
        $region20: #{tpu_custom_call.1} parent=11 // pred_fallthru
          _
        // Predicated region
        $region21: #{tpu_custom_call.1} parent=11 // pred_check
          %p210 = pneg %p132
        $region22: #{tpu_custom_call.1} parent=11 // pred_check_branch
          %212 = sbr.rel (%p210) target = $region24
        $region23: #{tpu_custom_call.1} parent=11 // pred_region
          %s214 = ssub.s32 8192, 8192
          %215 = vsyncadd [#allocation6], %s214
          %s216 = sshll.u32 [#allocation5], 4
          %s217 = int_to_ptr.vmem [resolvable:$true] %s216
          %222 = dma.hbm_to_vmem [thread:$0]  %s4, 8192, %s217, [#allocation6], 128, 128, 8
        $region24: #{tpu_custom_call.1} parent=11 // pred_fallthru
          _
        // Predicated region
        $region25: #{tpu_custom_call.1} parent=11 // pred_check
          %p223 = pneg %p153
        $region26: #{tpu_custom_call.1} parent=11 // pred_check_branch
          %225 = sbr.rel (%p223) target = $region28
        $region27: #{tpu_custom_call.1} parent=11 // pred_region
          _
        $region28: #{tpu_custom_call.1} parent=11 // pred_fallthru
          _
      $region12: #{tpu_custom_call.1} parent=5 // pred_fallthru
        _
      %p226 = scmp.lt.s32.totalorder %s17, 2
      // Predicated region
      $region29: #{tpu_custom_call.1} parent=5 // pred_check
        %p227 = pneg %p226
      $region30: #{tpu_custom_call.1} parent=5 // pred_check_branch
        %229 = sbr.rel (%p227) target = $region32
      $region31: #{tpu_custom_call.1} parent=5 // pred_region
        // Predicated region
        $region33: #{tpu_custom_call.1} parent=31 // pred_check
          %p230 = pneg %p37
        $region34: #{tpu_custom_call.1} parent=31 // pred_check_branch
          %232 = sbr.rel (%p230) target = $region36
        $region35: #{tpu_custom_call.1} parent=31 // pred_region
          %s233 = smul.u32 8, %s17
          %p234 = scmp.lt.s32.totalorder %s233, 15
          %s235 = scalar_select %p234, %s233, 15
          %s236 = smul.addr %s235, 8
          %s237 = scalar_lea.vmem %s0, %s236
          %s238 = smul.u32 8, %s17
        $region36: #{tpu_custom_call.1} parent=31 // pred_fallthru
          _
        // Predicated region
        $region37: #{tpu_custom_call.1} parent=31 // pred_check
          %p239 = pneg %p63
        $region38: #{tpu_custom_call.1} parent=31 // pred_check_branch
          %241 = sbr.rel (%p239) target = $region40
        $region39: #{tpu_custom_call.1} parent=31 // pred_region
          %s242 = smul.u32 8, %s17
          %p243 = scmp.lt.s32.totalorder %s242, 15
          %s244 = scalar_select %p243, %s242, 15
          %s245 = smul.addr %s244, 8
          %s246 = scalar_lea.vmem %s1, %s245
          %s247 = smul.u32 8, %s17
        $region40: #{tpu_custom_call.1} parent=31 // pred_fallthru
          _
      $region32: #{tpu_custom_call.1} parent=5 // pred_fallthru
        _
      %p248 = scmp.le.s32.totalorder 1, %s17
      %p249 = scmp.lt.s32.totalorder %s17, 3
      %p250 = pnand %p248, %p249
      %p251 = pneg %p250
      // Predicated region
      $region41: #{tpu_custom_call.1} parent=5 // pred_check
        _
      $region42: #{tpu_custom_call.1} parent=5 // pred_check_branch
        %253 = sbr.rel (%p250) target = $region44
      $region43: #{tpu_custom_call.1} parent=5 // pred_region
        %s254 = ssub.s32 %s17, 1
        // Predicated region
        $region45: #{tpu_custom_call.1} parent=43 // pred_check
          %p255 = pneg %p90
        $region46: #{tpu_custom_call.1} parent=43 // pred_check_branch
          %257 = sbr.rel (%p255) target = $region48
        $region47: #{tpu_custom_call.1} parent=43 // pred_region
          %258 = dma.done [#allocation3], 8192
        $region48: #{tpu_custom_call.1} parent=43 // pred_fallthru
          _
        // Predicated region
        $region49: #{tpu_custom_call.1} parent=43 // pred_check
          %p259 = pneg %p132
        $region50: #{tpu_custom_call.1} parent=43 // pred_check_branch
          %261 = sbr.rel (%p259) target = $region52
        $region51: #{tpu_custom_call.1} parent=43 // pred_region
          %262 = dma.done [#allocation6], 8192
        $region52: #{tpu_custom_call.1} parent=43 // pred_fallthru
          _
        %s263 = smul.u32 8, %s22
        %p264 = scmp.lt.s32.totalorder %s263, 15
        %s265 = scalar_select %p264, %s263, 15
        %s266 = smul.addr %s265, 8
        %s267 = scalar_lea.vmem %s0, %s266
        %p268 = pneg %p43
        %p269 = pneg %p40
        %s270 = smul.u32 8, %s22
        %p271 = scmp.lt.s32.totalorder %s270, 15
        %s272 = scalar_select %p271, %s270, 15
        %s273 = smul.addr %s272, 8
        %s274 = scalar_lea.vmem %s1, %s273
        %p275 = pneg %p69
        %p276 = pneg %p66
        %p277 = pneg %p90
        %p278 = pneg %p87
        %p279 = pneg %p111
        %p280 = pneg %p108
        %p281 = pneg %p132
        %p282 = pneg %p129
        %p283 = pneg %p153
        %p284 = pneg %p150
        %p285 = pneg %p179
        %p286 = pneg %p176
        %s287 = sand.u32 %s166, 1
        %s288 = scalar_lea.sflag [#allocation4], %s287
        %s289 = sand.u32 %s166, 1
        %s290 = smul.addr %s289, 64
        %s291 = scalar_lea.vmem [#allocation7], %s290
        %s292 = smul.u32 8, %s22
        %p293 = scmp.lt.s32.totalorder %s292, 15
        %s294 = scalar_select %p293, %s292, 15
        %s295 = smul.addr %s294, 8
        %s296 = scalar_lea.vmem %s0, %s295
        %s297 = smul.u32 8, %s22
        %s298 = smul.u32 8, %s22
        %p299 = scmp.lt.s32.totalorder %s298, 15
        %s300 = scalar_select %p299, %s298, 15
        %s301 = smul.addr %s300, 8
        %s302 = scalar_lea.vmem %s1, %s301
        %s303 = smul.u32 8, %s22
        %s304 = smul.u32 8, %s22
        %v305 = vld [vmem:[%s296] sm:$0xff]
        %v306 = vld [vmem:[%s296 + $0x8] sm:$0xff]
        %v307 = vld [vmem:[%s296 + $0x10] sm:$0xff]
        %v308 = vld [vmem:[%s296 + $0x18] sm:$0xff]
        %v309 = vld [vmem:[%s296 + $0x20] sm:$0xff]
        %v310 = vld [vmem:[%s296 + $0x28] sm:$0xff]
        %v311 = vld [vmem:[%s296 + $0x30] sm:$0xff]
        %v312 = vld [vmem:[%s296 + $0x38] sm:$0xff]
        %v313 = vld [vmem:[#allocation2] sm:$0xff]
        %v314 = vld [vmem:[#allocation2 + $0x8] sm:$0xff]
        %v315 = vld [vmem:[#allocation2 + $0x10] sm:$0xff]
        %v316 = vld [vmem:[#allocation2 + $0x18] sm:$0xff]
        %v317 = vld [vmem:[#allocation2 + $0x20] sm:$0xff]
        %v318 = vld [vmem:[#allocation2 + $0x28] sm:$0xff]
        %v319 = vld [vmem:[#allocation2 + $0x30] sm:$0xff]
        %v320 = vld [vmem:[#allocation2 + $0x38] sm:$0xff]
        %v321 = vld [vmem:[#allocation2 + $0x40] sm:$0xff]
        %v322 = vld [vmem:[#allocation2 + $0x48] sm:$0xff]
        %v323 = vld [vmem:[#allocation2 + $0x50] sm:$0xff]
        %v324 = vld [vmem:[#allocation2 + $0x58] sm:$0xff]
        %v325 = vld [vmem:[#allocation2 + $0x60] sm:$0xff]
        %v326 = vld [vmem:[#allocation2 + $0x68] sm:$0xff]
        %v327 = vld [vmem:[#allocation2 + $0x70] sm:$0xff]
        %v328 = vld [vmem:[#allocation2 + $0x78] sm:$0xff]
        %v329 = vld [vmem:[#allocation2 + $0x80] sm:$0xff]
        %v330 = vld [vmem:[#allocation2 + $0x88] sm:$0xff]
        %v331 = vld [vmem:[#allocation2 + $0x90] sm:$0xff]
        %v332 = vld [vmem:[#allocation2 + $0x98] sm:$0xff]
        %v333 = vld [vmem:[#allocation2 + $0xa0] sm:$0xff]
        %v334 = vld [vmem:[#allocation2 + $0xa8] sm:$0xff]
        %v335 = vld [vmem:[#allocation2 + $0xb0] sm:$0xff]
        %v336 = vld [vmem:[#allocation2 + $0xb8] sm:$0xff]
        %v337 = vld [vmem:[#allocation2 + $0xc0] sm:$0xff]
        %v338 = vld [vmem:[#allocation2 + $0xc8] sm:$0xff]
        %v339 = vld [vmem:[#allocation2 + $0xd0] sm:$0xff]
        %v340 = vld [vmem:[#allocation2 + $0xd8] sm:$0xff]
        %v341 = vld [vmem:[#allocation2 + $0xe0] sm:$0xff]
        %v342 = vld [vmem:[#allocation2 + $0xe8] sm:$0xff]
        %v343 = vld [vmem:[#allocation2 + $0xf0] sm:$0xff]
        %v344 = vld [vmem:[#allocation2 + $0xf8] sm:$0xff]
        %v345 = vld [vmem:[%s3] ss:$2 sm:$0x3]
        %v347 = vlaneseq
        %v348 = vshrl.u32 %v347, 7
        %v349 = vsub.s32 0, %v348
        %v350 = vrot.slane %v345, %v349
        %v351 = vlaneseq
        %v352 = vshrl.u32 %v351, 7
        %v353 = vsub.s32 1, %v352
        %v354 = vrot.slane %v345, %v353
        %357 = vmatprep.subr.mxu0 %v314
        %358 = vmatpush1.msra.mxu0 %v313
        %359 = vmatprep.subr.mxu0 %v316
        %360 = vmatpush1.msra.mxu0 %v315
        %361 = vmatprep.subr.mxu0 %v318
        %362 = vmatpush1.msra.mxu0 %v317
        %363 = vmatprep.subr.mxu0 %v320
        %364 = vmatpush1.msra.mxu0 %v319
        %365 = vmatprep.subr.mxu0 %v322
        %366 = vmatpush1.msra.mxu0 %v321
        %367 = vmatprep.subr.mxu0 %v324
        %368 = vmatpush1.msra.mxu0 %v323
        %369 = vmatprep.subr.mxu0 %v326
        %370 = vmatpush1.msra.mxu0 %v325
        %371 = vmatprep.subr.mxu0 %v328
        %372 = vmatpush1.msra.mxu0 %v327
        %373 = vmatprep.subr.mxu0 %v330
        %374 = vmatpush1.msra.mxu0 %v329
        %375 = vmatprep.subr.mxu0 %v332
        %376 = vmatpush1.msra.mxu0 %v331
        %377 = vmatprep.subr.mxu0 %v334
        %378 = vmatpush1.msra.mxu0 %v333
        %379 = vmatprep.subr.mxu0 %v336
        %380 = vmatpush1.msra.mxu0 %v335
        %381 = vmatprep.subr.mxu0 %v338
        %382 = vmatpush1.msra.mxu0 %v337
        %383 = vmatprep.subr.mxu0 %v340
        %384 = vmatpush1.msra.mxu0 %v339
        %385 = vmatprep.subr.mxu0 %v342
        %386 = vmatpush1.msra.mxu0 %v341
        %387 = vmatprep.subr.mxu0 %v344
        %388 = vmatpush1.msra.mxu0 %v343
        %389 = vmatprep.subr.mxu0 0.0
        %390 = vmatpush1.msra.mxu0 0.0
        %391 = vmatprep.subr.mxu0 0.0
        %392 = vmatpush1.msra.mxu0 0.0
        %393 = vmatprep.subr.mxu0 0.0
        %394 = vmatpush1.msra.mxu0 0.0
        %395 = vmatprep.subr.mxu0 0.0
        %396 = vmatpush1.msra.mxu0 0.0
        %397 = vmatprep.subr.mxu0 0.0
        %398 = vmatpush1.msra.mxu0 0.0
        %399 = vmatprep.subr.mxu0 0.0
        %400 = vmatpush1.msra.mxu0 0.0
        %401 = vmatprep.subr.mxu0 0.0
        %402 = vmatpush1.msra.mxu0 0.0
        %403 = vmatprep.subr.mxu0 0.0
        %404 = vmatpush1.msra.mxu0 0.0
        %405 = vmatprep.subr.mxu0 0.0
        %406 = vmatpush1.msra.mxu0 0.0
        %407 = vmatprep.subr.mxu0 0.0
        %408 = vmatpush1.msra.mxu0 0.0
        %409 = vmatprep.subr.mxu0 0.0
        %410 = vmatpush1.msra.mxu0 0.0
        %411 = vmatprep.subr.mxu0 0.0
        %412 = vmatpush1.msra.mxu0 0.0
        %413 = vmatprep.subr.mxu0 0.0
        %414 = vmatpush1.msra.mxu0 0.0
        %415 = vmatprep.subr.mxu0 0.0
        %416 = vmatpush1.msra.mxu0 0.0
        %417 = vmatprep.subr.mxu0 0.0
        %418 = vmatpush1.msra.mxu0 0.0
        %419 = vmatprep.subr.mxu0 0.0
        %420 = vmatpush1.msra.mxu0 0.0
        %421 = vmatprep.mubr.f32.mxu0 0.0
        %422 = vmatmul.mubr.f32.gmra.mrb[0].mxu0 %v305
        %v423 = vpop.f32.mrb[0].mxu0
        %v424 = vadd.f32 %v350, %v423
        %v425 = vpop.f32.mrb[0].mxu0
        %v426 = vadd.f32 %v354, %v425
        %427 = vmatprep.mubr.f32.mxu0 0.0
        %428 = vmatmul.mubr.f32.gmra.mrb[0].mxu0 %v306
        %v429 = vpop.f32.mrb[0].mxu0
        %v430 = vadd.f32 %v350, %v429
        %v431 = vpop.f32.mrb[0].mxu0
        %v432 = vadd.f32 %v354, %v431
        %433 = vmatprep.mubr.f32.mxu0 0.0
        %434 = vmatmul.mubr.f32.gmra.mrb[0].mxu0 %v307
        %v435 = vpop.f32.mrb[0].mxu0
        %v436 = vadd.f32 %v350, %v435
        %v437 = vpop.f32.mrb[0].mxu0
        %v438 = vadd.f32 %v354, %v437
        %439 = vmatprep.mubr.f32.mxu0 0.0
        %440 = vmatmul.mubr.f32.gmra.mrb[0].mxu0 %v308
        %v441 = vpop.f32.mrb[0].mxu0
        %v442 = vadd.f32 %v350, %v441
        %v443 = vpop.f32.mrb[0].mxu0
        %v444 = vadd.f32 %v354, %v443
        %445 = vmatprep.mubr.f32.mxu0 0.0
        %446 = vmatmul.mubr.f32.gmra.mrb[0].mxu0 %v309
        %v447 = vpop.f32.mrb[0].mxu0
        %v448 = vadd.f32 %v350, %v447
        %v449 = vpop.f32.mrb[0].mxu0
        %v450 = vadd.f32 %v354, %v449
        %451 = vmatprep.mubr.f32.mxu0 0.0
        %452 = vmatmul.mubr.f32.gmra.mrb[0].mxu0 %v310
        %v453 = vpop.f32.mrb[0].mxu0
        %v454 = vadd.f32 %v350, %v453
        %v455 = vpop.f32.mrb[0].mxu0
        %v456 = vadd.f32 %v354, %v455
        %457 = vmatprep.mubr.f32.mxu0 0.0
        %458 = vmatmul.mubr.f32.gmra.mrb[0].mxu0 %v311
        %v459 = vpop.f32.mrb[0].mxu0
        %v460 = vadd.f32 %v350, %v459
        %v461 = vpop.f32.mrb[0].mxu0
        %v462 = vadd.f32 %v354, %v461
        %463 = vmatprep.mubr.f32.mxu0 0.0
        %464 = vmatmul.mubr.f32.gmra.mrb[0].mxu0 %v312
        %v465 = vpop.f32.mrb[0].mxu0
        %v466 = vadd.f32 %v350, %v465
        %v467 = vpop.f32.mrb[0].mxu0
        %v468 = vadd.f32 %v354, %v467
        %469 = vdwg.mxu0
        %v470 = vmul.f32 %v424, %v424
        %v471 = vmul.f32 %v426, %v426
        %v472 = vmul.f32 %v430, %v430
        %v473 = vmul.f32 %v432, %v432
        %v474 = vmul.f32 %v436, %v436
        %v475 = vmul.f32 %v438, %v438
        %v476 = vmul.f32 %v442, %v442
        %v477 = vmul.f32 %v444, %v444
        %v478 = vmul.f32 %v448, %v448
        %v479 = vmul.f32 %v450, %v450
        %v480 = vmul.f32 %v454, %v454
        %v481 = vmul.f32 %v456, %v456
        %v482 = vmul.f32 %v460, %v460
        %v483 = vmul.f32 %v462, %v462
        %v484 = vmul.f32 %v466, %v466
        %v485 = vmul.f32 %v468, %v468
        %v486 = vmul.f32 %v424, %v470
        %v487 = vmul.f32 %v426, %v471
        %v488 = vmul.f32 %v430, %v472
        %v489 = vmul.f32 %v432, %v473
        %v490 = vmul.f32 %v436, %v474
        %v491 = vmul.f32 %v438, %v475
        %v492 = vmul.f32 %v442, %v476
        %v493 = vmul.f32 %v444, %v477
        %v494 = vmul.f32 %v448, %v478
        %v495 = vmul.f32 %v450, %v479
        %v496 = vmul.f32 %v454, %v480
        %v497 = vmul.f32 %v456, %v481
        %v498 = vmul.f32 %v460, %v482
        %v499 = vmul.f32 %v462, %v483
        %v500 = vmul.f32 %v466, %v484
        %v501 = vmul.f32 %v468, %v485
        %v502 = vmul.f32 %v486, 0.044715
        %v503 = vmul.f32 %v487, 0.044715
        %v504 = vmul.f32 %v488, 0.044715
        %v505 = vmul.f32 %v489, 0.044715
        %v506 = vmul.f32 %v490, 0.044715
        %v507 = vmul.f32 %v491, 0.044715
        %v508 = vmul.f32 %v492, 0.044715
        %v509 = vmul.f32 %v493, 0.044715
        %v510 = vmul.f32 %v494, 0.044715
        %v511 = vmul.f32 %v495, 0.044715
        %v512 = vmul.f32 %v496, 0.044715
        %v513 = vmul.f32 %v497, 0.044715
        %v514 = vmul.f32 %v498, 0.044715
        %v515 = vmul.f32 %v499, 0.044715
        %v516 = vmul.f32 %v500, 0.044715
        %v517 = vmul.f32 %v501, 0.044715
        %v518 = vadd.f32 %v424, %v502
        %v519 = vadd.f32 %v426, %v503
        %v520 = vadd.f32 %v430, %v504
        %v521 = vadd.f32 %v432, %v505
        %v522 = vadd.f32 %v436, %v506
        %v523 = vadd.f32 %v438, %v507
        %v524 = vadd.f32 %v442, %v508
        %v525 = vadd.f32 %v444, %v509
        %v526 = vadd.f32 %v448, %v510
        %v527 = vadd.f32 %v450, %v511
        %v528 = vadd.f32 %v454, %v512
        %v529 = vadd.f32 %v456, %v513
        %v530 = vadd.f32 %v460, %v514
        %v531 = vadd.f32 %v462, %v515
        %v532 = vadd.f32 %v466, %v516
        %v533 = vadd.f32 %v468, %v517
        %v534 = vmul.f32 %v518, 0.7978846
        %v535 = vmul.f32 %v519, 0.7978846
        %v536 = vmul.f32 %v520, 0.7978846
        %v537 = vmul.f32 %v521, 0.7978846
        %v538 = vmul.f32 %v522, 0.7978846
        %v539 = vmul.f32 %v523, 0.7978846
        %v540 = vmul.f32 %v524, 0.7978846
        %v541 = vmul.f32 %v525, 0.7978846
        %v542 = vmul.f32 %v526, 0.7978846
        %v543 = vmul.f32 %v527, 0.7978846
        %v544 = vmul.f32 %v528, 0.7978846
        %v545 = vmul.f32 %v529, 0.7978846
        %v546 = vmul.f32 %v530, 0.7978846
        %v547 = vmul.f32 %v531, 0.7978846
        %v548 = vmul.f32 %v532, 0.7978846
        %v549 = vmul.f32 %v533, 0.7978846
        %v550 = vtanh.pop %v534
        %v551 = vtanh.pop %v535
        %v552 = vtanh.pop %v536
        %v553 = vtanh.pop %v537
        %v554 = vtanh.pop %v538
        %v555 = vtanh.pop %v539
        %v556 = vtanh.pop %v540
        %v557 = vtanh.pop %v541
        %v558 = vtanh.pop %v542
        %v559 = vtanh.pop %v543
        %v560 = vtanh.pop %v544
        %v561 = vtanh.pop %v545
        %v562 = vtanh.pop %v546
        %v563 = vtanh.pop %v547
        %v564 = vtanh.pop %v548
        %v565 = vtanh.pop %v549
        %v566 = vadd.f32 %v550, 1.0
        %v567 = vadd.f32 %v551, 1.0
        %v568 = vadd.f32 %v552, 1.0
        %v569 = vadd.f32 %v553, 1.0
        %v570 = vadd.f32 %v554, 1.0
        %v571 = vadd.f32 %v555, 1.0
        %v572 = vadd.f32 %v556, 1.0
        %v573 = vadd.f32 %v557, 1.0
        %v574 = vadd.f32 %v558, 1.0
        %v575 = vadd.f32 %v559, 1.0
        %v576 = vadd.f32 %v560, 1.0
        %v577 = vadd.f32 %v561, 1.0
        %v578 = vadd.f32 %v562, 1.0
        %v579 = vadd.f32 %v563, 1.0
        %v580 = vadd.f32 %v564, 1.0
        %v581 = vadd.f32 %v565, 1.0
        %v582 = vmul.f32 %v566, 0.5
        %v583 = vmul.f32 %v567, 0.5
        %v584 = vmul.f32 %v568, 0.5
        %v585 = vmul.f32 %v569, 0.5
        %v586 = vmul.f32 %v570, 0.5
        %v587 = vmul.f32 %v571, 0.5
        %v588 = vmul.f32 %v572, 0.5
        %v589 = vmul.f32 %v573, 0.5
        %v590 = vmul.f32 %v574, 0.5
        %v591 = vmul.f32 %v575, 0.5
        %v592 = vmul.f32 %v576, 0.5
        %v593 = vmul.f32 %v577, 0.5
        %v594 = vmul.f32 %v578, 0.5
        %v595 = vmul.f32 %v579, 0.5
        %v596 = vmul.f32 %v580, 0.5
        %v597 = vmul.f32 %v581, 0.5
        %v598 = vmul.f32 %v424, %v582
        %v599 = vmul.f32 %v426, %v583
        %v600 = vmul.f32 %v430, %v584
        %v601 = vmul.f32 %v432, %v585
        %v602 = vmul.f32 %v436, %v586
        %v603 = vmul.f32 %v438, %v587
        %v604 = vmul.f32 %v442, %v588
        %v605 = vmul.f32 %v444, %v589
        %v606 = vmul.f32 %v448, %v590
        %v607 = vmul.f32 %v450, %v591
        %v608 = vmul.f32 %v454, %v592
        %v609 = vmul.f32 %v456, %v593
        %v610 = vmul.f32 %v460, %v594
        %v611 = vmul.f32 %v462, %v595
        %v612 = vmul.f32 %v466, %v596
        %v613 = vmul.f32 %v468, %v597
        %v614 = vld [vmem:[#allocation5] sm:$0xff]
        %v615 = vld [vmem:[#allocation5 + $0x8] sm:$0xff]
        %v616 = vld [vmem:[#allocation5 + $0x10] sm:$0xff]
        %v617 = vld [vmem:[#allocation5 + $0x18] sm:$0xff]
        %v618 = vld [vmem:[#allocation5 + $0x20] sm:$0xff]
        %v619 = vld [vmem:[#allocation5 + $0x28] sm:$0xff]
        %v620 = vld [vmem:[#allocation5 + $0x30] sm:$0xff]
        %v621 = vld [vmem:[#allocation5 + $0x38] sm:$0xff]
        %v622 = vld [vmem:[#allocation5 + $0x40] sm:$0xff]
        %v623 = vld [vmem:[#allocation5 + $0x48] sm:$0xff]
        %v624 = vld [vmem:[#allocation5 + $0x50] sm:$0xff]
        %v625 = vld [vmem:[#allocation5 + $0x58] sm:$0xff]
        %v626 = vld [vmem:[#allocation5 + $0x60] sm:$0xff]
        %v627 = vld [vmem:[#allocation5 + $0x68] sm:$0xff]
        %v628 = vld [vmem:[#allocation5 + $0x70] sm:$0xff]
        %v629 = vld [vmem:[#allocation5 + $0x78] sm:$0xff]
        %v630 = vld [vmem:[#allocation5 + $0x80] sm:$0xff]
        %v631 = vld [vmem:[#allocation5 + $0x88] sm:$0xff]
        %v632 = vld [vmem:[#allocation5 + $0x90] sm:$0xff]
        %v633 = vld [vmem:[#allocation5 + $0x98] sm:$0xff]
        %v634 = vld [vmem:[#allocation5 + $0xa0] sm:$0xff]
        %v635 = vld [vmem:[#allocation5 + $0xa8] sm:$0xff]
        %v636 = vld [vmem:[#allocation5 + $0xb0] sm:$0xff]
        %v637 = vld [vmem:[#allocation5 + $0xb8] sm:$0xff]
        %v638 = vld [vmem:[#allocation5 + $0xc0] sm:$0xff]
        %v639 = vld [vmem:[#allocation5 + $0xc8] sm:$0xff]
        %v640 = vld [vmem:[#allocation5 + $0xd0] sm:$0xff]
        %v641 = vld [vmem:[#allocation5 + $0xd8] sm:$0xff]
        %v642 = vld [vmem:[#allocation5 + $0xe0] sm:$0xff]
        %v643 = vld [vmem:[#allocation5 + $0xe8] sm:$0xff]
        %v644 = vld [vmem:[#allocation5 + $0xf0] sm:$0xff]
        %v645 = vld [vmem:[#allocation5 + $0xf8] sm:$0xff]
        %v646 = vld [vmem:[%s5] sm:$0x1]
        %v647 = vlaneseq
        %v648 = vshrl.u32 %v647, 7
        %v649 = vsub.s32 0, %v648
        %v650 = vrot.slane %v646, %v649
        %651 = vmatprep.subr.mxu0 0.0
        %652 = vmatpush1.msra.mxu0 %v614
        %653 = vmatprep.subr.mxu0 0.0
        %654 = vmatpush1.msra.mxu0 %v615
        %655 = vmatprep.subr.mxu0 0.0
        %656 = vmatpush1.msra.mxu0 %v616
        %657 = vmatprep.subr.mxu0 0.0
        %658 = vmatpush1.msra.mxu0 %v617
        %659 = vmatprep.subr.mxu0 0.0
        %660 = vmatpush1.msra.mxu0 %v618
        %661 = vmatprep.subr.mxu0 0.0
        %662 = vmatpush1.msra.mxu0 %v619
        %663 = vmatprep.subr.mxu0 0.0
        %664 = vmatpush1.msra.mxu0 %v620
        %665 = vmatprep.subr.mxu0 0.0
        %666 = vmatpush1.msra.mxu0 %v621
        %667 = vmatprep.subr.mxu0 0.0
        %668 = vmatpush1.msra.mxu0 %v622
        %669 = vmatprep.subr.mxu0 0.0
        %670 = vmatpush1.msra.mxu0 %v623
        %671 = vmatprep.subr.mxu0 0.0
        %672 = vmatpush1.msra.mxu0 %v624
        %673 = vmatprep.subr.mxu0 0.0
        %674 = vmatpush1.msra.mxu0 %v625
        %675 = vmatprep.subr.mxu0 0.0
        %676 = vmatpush1.msra.mxu0 %v626
        %677 = vmatprep.subr.mxu0 0.0
        %678 = vmatpush1.msra.mxu0 %v627
        %679 = vmatprep.subr.mxu0 0.0
        %680 = vmatpush1.msra.mxu0 %v628
        %681 = vmatprep.subr.mxu0 0.0
        %682 = vmatpush1.msra.mxu0 %v629
        %683 = vmatprep.subr.mxu0 0.0
        %684 = vmatpush1.msra.mxu0 %v630
        %685 = vmatprep.subr.mxu0 0.0
        %686 = vmatpush1.msra.mxu0 %v631
        %687 = vmatprep.subr.mxu0 0.0
        %688 = vmatpush1.msra.mxu0 %v632
        %689 = vmatprep.subr.mxu0 0.0
        %690 = vmatpush1.msra.mxu0 %v633
        %691 = vmatprep.subr.mxu0 0.0
        %692 = vmatpush1.msra.mxu0 %v634
        %693 = vmatprep.subr.mxu0 0.0
        %694 = vmatpush1.msra.mxu0 %v635
        %695 = vmatprep.subr.mxu0 0.0
        %696 = vmatpush1.msra.mxu0 %v636
        %697 = vmatprep.subr.mxu0 0.0
        %698 = vmatpush1.msra.mxu0 %v637
        %699 = vmatprep.subr.mxu0 0.0
        %700 = vmatpush1.msra.mxu0 %v638
        %701 = vmatprep.subr.mxu0 0.0
        %702 = vmatpush1.msra.mxu0 %v639
        %703 = vmatprep.subr.mxu0 0.0
        %704 = vmatpush1.msra.mxu0 %v640
        %705 = vmatprep.subr.mxu0 0.0
        %706 = vmatpush1.msra.mxu0 %v641
        %707 = vmatprep.subr.mxu0 0.0
        %708 = vmatpush1.msra.mxu0 %v642
        %709 = vmatprep.subr.mxu0 0.0
        %710 = vmatpush1.msra.mxu0 %v643
        %711 = vmatprep.subr.mxu0 0.0
        %712 = vmatpush1.msra.mxu0 %v644
        %713 = vmatprep.subr.mxu0 0.0
        %714 = vmatpush1.msra.mxu0 %v645
        %715 = vmatprep.mubr.f32.mxu0 %v599
        %716 = vmatmul.mubr.f32.gmra.mrb[0].mxu0 %v598
        %v717 = vpop.f32.mrb[0].mxu0
        %v718 = vadd.f32 %v650, %v717
        %v719 = vpop.f32.mrb[0].mxu0
        %720 = vmatprep.mubr.f32.mxu0 %v601
        %721 = vmatmul.mubr.f32.gmra.mrb[0].mxu0 %v600
        %v722 = vpop.f32.mrb[0].mxu0
        %v723 = vadd.f32 %v650, %v722
        %v724 = vpop.f32.mrb[0].mxu0
        %725 = vmatprep.mubr.f32.mxu0 %v603
        %726 = vmatmul.mubr.f32.gmra.mrb[0].mxu0 %v602
        %v727 = vpop.f32.mrb[0].mxu0
        %v728 = vadd.f32 %v650, %v727
        %v729 = vpop.f32.mrb[0].mxu0
        %730 = vmatprep.mubr.f32.mxu0 %v605
        %731 = vmatmul.mubr.f32.gmra.mrb[0].mxu0 %v604
        %v732 = vpop.f32.mrb[0].mxu0
        %v733 = vadd.f32 %v650, %v732
        %v734 = vpop.f32.mrb[0].mxu0
        %735 = vmatprep.mubr.f32.mxu0 %v607
        %736 = vmatmul.mubr.f32.gmra.mrb[0].mxu0 %v606
        %v737 = vpop.f32.mrb[0].mxu0
        %v738 = vadd.f32 %v650, %v737
        %v739 = vpop.f32.mrb[0].mxu0
        %740 = vmatprep.mubr.f32.mxu0 %v609
        %741 = vmatmul.mubr.f32.gmra.mrb[0].mxu0 %v608
        %v742 = vpop.f32.mrb[0].mxu0
        %v743 = vadd.f32 %v650, %v742
        %v744 = vpop.f32.mrb[0].mxu0
        %745 = vmatprep.mubr.f32.mxu0 %v611
        %746 = vmatmul.mubr.f32.gmra.mrb[0].mxu0 %v610
        %v747 = vpop.f32.mrb[0].mxu0
        %v748 = vadd.f32 %v650, %v747
        %v749 = vpop.f32.mrb[0].mxu0
        %750 = vmatprep.mubr.f32.mxu0 %v613
        %751 = vmatmul.mubr.f32.gmra.mrb[0].mxu0 %v612
        %v752 = vpop.f32.mrb[0].mxu0
        %v753 = vadd.f32 %v650, %v752
        %v754 = vpop.f32.mrb[0].mxu0
        %755 = vdwg.mxu0
        %v756 = vld [vmem:[%s302] sm:$0xff]
        %v757 = vld [vmem:[%s302 + $0x8] sm:$0xff]
        %v758 = vld [vmem:[%s302 + $0x10] sm:$0xff]
        %v759 = vld [vmem:[%s302 + $0x18] sm:$0xff]
        %v760 = vld [vmem:[%s302 + $0x20] sm:$0xff]
        %v761 = vld [vmem:[%s302 + $0x28] sm:$0xff]
        %v762 = vld [vmem:[%s302 + $0x30] sm:$0xff]
        %v763 = vld [vmem:[%s302 + $0x38] sm:$0xff]
        %765 = vset.pattern.permute.xlu0 0
        %766 = vperm.xlu0 %765, %v756
        %v767 = vpop.permute.xlu0 %766
        %770 = vset.pattern.permute.xlu0 0
        %771 = vperm.xlu0 %770, %v757
        %v772 = vpop.permute.xlu0 %771
        %775 = vset.pattern.permute.xlu0 0
        %776 = vperm.xlu0 %775, %v758
        %v777 = vpop.permute.xlu0 %776
        %780 = vset.pattern.permute.xlu0 0
        %781 = vperm.xlu0 %780, %v759
        %v782 = vpop.permute.xlu0 %781
        %785 = vset.pattern.permute.xlu0 0
        %786 = vperm.xlu0 %785, %v760
        %v787 = vpop.permute.xlu0 %786
        %790 = vset.pattern.permute.xlu0 0
        %791 = vperm.xlu0 %790, %v761
        %v792 = vpop.permute.xlu0 %791
        %795 = vset.pattern.permute.xlu0 0
        %796 = vperm.xlu0 %795, %v762
        %v797 = vpop.permute.xlu0 %796
        %800 = vset.pattern.permute.xlu0 0
        %801 = vperm.xlu0 %800, %v763
        %v802 = vpop.permute.xlu0 %801
        %v804 = vmul.f32 %v767, %v718
        %v805 = vmul.f32 %v772, %v723
        %v806 = vmul.f32 %v777, %v728
        %v807 = vmul.f32 %v782, %v733
        %v808 = vmul.f32 %v787, %v738
        %v809 = vmul.f32 %v792, %v743
        %v810 = vmul.f32 %v797, %v748
        %v811 = vmul.f32 %v802, %v753
        %v812 = vadd.f32 %v804, 0.0
        %v813 = vadd.f32 %v805, 0.0
        %v814 = vadd.f32 %v806, 0.0
        %v815 = vadd.f32 %v807, 0.0
        %v816 = vadd.f32 %v808, 0.0
        %v817 = vadd.f32 %v809, 0.0
        %v818 = vadd.f32 %v810, 0.0
        %v819 = vadd.f32 %v811, 0.0
        %s820 = scalar_lea.vmem [#allocation2], 256
        %v821 = vld [vmem:[%s820] sm:$0xff]
        %v822 = vld [vmem:[%s820 + $0x8] sm:$0xff]
        %v823 = vld [vmem:[%s820 + $0x10] sm:$0xff]
        %v824 = vld [vmem:[%s820 + $0x18] sm:$0xff]
        %v825 = vld [vmem:[%s820 + $0x20] sm:$0xff]
        %v826 = vld [vmem:[%s820 + $0x28] sm:$0xff]
        %v827 = vld [vmem:[%s820 + $0x30] sm:$0xff]
        %v828 = vld [vmem:[%s820 + $0x38] sm:$0xff]
        %v829 = vld [vmem:[%s820 + $0x40] sm:$0xff]
        %v830 = vld [vmem:[%s820 + $0x48] sm:$0xff]
        %v831 = vld [vmem:[%s820 + $0x50] sm:$0xff]
        %v832 = vld [vmem:[%s820 + $0x58] sm:$0xff]
        %v833 = vld [vmem:[%s820 + $0x60] sm:$0xff]
        %v834 = vld [vmem:[%s820 + $0x68] sm:$0xff]
        %v835 = vld [vmem:[%s820 + $0x70] sm:$0xff]
        %v836 = vld [vmem:[%s820 + $0x78] sm:$0xff]
        %v837 = vld [vmem:[%s820 + $0x80] sm:$0xff]
        %v838 = vld [vmem:[%s820 + $0x88] sm:$0xff]
        %v839 = vld [vmem:[%s820 + $0x90] sm:$0xff]
        %v840 = vld [vmem:[%s820 + $0x98] sm:$0xff]
        %v841 = vld [vmem:[%s820 + $0xa0] sm:$0xff]
        %v842 = vld [vmem:[%s820 + $0xa8] sm:$0xff]
        %v843 = vld [vmem:[%s820 + $0xb0] sm:$0xff]
        %v844 = vld [vmem:[%s820 + $0xb8] sm:$0xff]
        %v845 = vld [vmem:[%s820 + $0xc0] sm:$0xff]
        %v846 = vld [vmem:[%s820 + $0xc8] sm:$0xff]
        %v847 = vld [vmem:[%s820 + $0xd0] sm:$0xff]
        %v848 = vld [vmem:[%s820 + $0xd8] sm:$0xff]
        %v849 = vld [vmem:[%s820 + $0xe0] sm:$0xff]
        %v850 = vld [vmem:[%s820 + $0xe8] sm:$0xff]
        %v851 = vld [vmem:[%s820 + $0xf0] sm:$0xff]
        %v852 = vld [vmem:[%s820 + $0xf8] sm:$0xff]
        %s853 = scalar_lea.vmem %s3, 1
        %v854 = vld [vmem:[%s853] ss:$2 sm:$0x3]
        %v856 = vlaneseq
        %v857 = vshrl.u32 %v856, 7
        %v858 = vsub.s32 0, %v857
        %v859 = vrot.slane %v854, %v858
        %v860 = vlaneseq
        %v861 = vshrl.u32 %v860, 7
        %v862 = vsub.s32 1, %v861
        %v863 = vrot.slane %v854, %v862
        %866 = vmatprep.subr.mxu0 %v822
        %867 = vmatpush1.msra.mxu0 %v821
        %868 = vmatprep.subr.mxu0 %v824
        %869 = vmatpush1.msra.mxu0 %v823
        %870 = vmatprep.subr.mxu0 %v826
        %871 = vmatpush1.msra.mxu0 %v825
        %872 = vmatprep.subr.mxu0 %v828
        %873 = vmatpush1.msra.mxu0 %v827
        %874 = vmatprep.subr.mxu0 %v830
        %875 = vmatpush1.msra.mxu0 %v829
        %876 = vmatprep.subr.mxu0 %v832
        %877 = vmatpush1.msra.mxu0 %v831
        %878 = vmatprep.subr.mxu0 %v834
        %879 = vmatpush1.msra.mxu0 %v833
        %880 = vmatprep.subr.mxu0 %v836
        %881 = vmatpush1.msra.mxu0 %v835
        %882 = vmatprep.subr.mxu0 %v838
        %883 = vmatpush1.msra.mxu0 %v837
        %884 = vmatprep.subr.mxu0 %v840
        %885 = vmatpush1.msra.mxu0 %v839
        %886 = vmatprep.subr.mxu0 %v842
        %887 = vmatpush1.msra.mxu0 %v841
        %888 = vmatprep.subr.mxu0 %v844
        %889 = vmatpush1.msra.mxu0 %v843
        %890 = vmatprep.subr.mxu0 %v846
        %891 = vmatpush1.msra.mxu0 %v845
        %892 = vmatprep.subr.mxu0 %v848
        %893 = vmatpush1.msra.mxu0 %v847
        %894 = vmatprep.subr.mxu0 %v850
        %895 = vmatpush1.msra.mxu0 %v849
        %896 = vmatprep.subr.mxu0 %v852
        %897 = vmatpush1.msra.mxu0 %v851
        %898 = vmatprep.subr.mxu0 0.0
        %899 = vmatpush1.msra.mxu0 0.0
        %900 = vmatprep.subr.mxu0 0.0
        %901 = vmatpush1.msra.mxu0 0.0
        %902 = vmatprep.subr.mxu0 0.0
        %903 = vmatpush1.msra.mxu0 0.0
        %904 = vmatprep.subr.mxu0 0.0
        %905 = vmatpush1.msra.mxu0 0.0
        %906 = vmatprep.subr.mxu0 0.0
        %907 = vmatpush1.msra.mxu0 0.0
        %908 = vmatprep.subr.mxu0 0.0
        %909 = vmatpush1.msra.mxu0 0.0
        %910 = vmatprep.subr.mxu0 0.0
        %911 = vmatpush1.msra.mxu0 0.0
        %912 = vmatprep.subr.mxu0 0.0
        %913 = vmatpush1.msra.mxu0 0.0
        %914 = vmatprep.subr.mxu0 0.0
        %915 = vmatpush1.msra.mxu0 0.0
        %916 = vmatprep.subr.mxu0 0.0
        %917 = vmatpush1.msra.mxu0 0.0
        %918 = vmatprep.subr.mxu0 0.0
        %919 = vmatpush1.msra.mxu0 0.0
        %920 = vmatprep.subr.mxu0 0.0
        %921 = vmatpush1.msra.mxu0 0.0
        %922 = vmatprep.subr.mxu0 0.0
        %923 = vmatpush1.msra.mxu0 0.0
        %924 = vmatprep.subr.mxu0 0.0
        %925 = vmatpush1.msra.mxu0 0.0
        %926 = vmatprep.subr.mxu0 0.0
        %927 = vmatpush1.msra.mxu0 0.0
        %928 = vmatprep.subr.mxu0 0.0
        %929 = vmatpush1.msra.mxu0 0.0
        %930 = vmatprep.mubr.f32.mxu0 0.0
        %931 = vmatmul.mubr.f32.gmra.mrb[0].mxu0 %v305
        %v932 = vpop.f32.mrb[0].mxu0
        %v933 = vadd.f32 %v859, %v932
        %v934 = vpop.f32.mrb[0].mxu0
        %v935 = vadd.f32 %v863, %v934
        %936 = vmatprep.mubr.f32.mxu0 0.0
        %937 = vmatmul.mubr.f32.gmra.mrb[0].mxu0 %v306
        %v938 = vpop.f32.mrb[0].mxu0
        %v939 = vadd.f32 %v859, %v938
        %v940 = vpop.f32.mrb[0].mxu0
        %v941 = vadd.f32 %v863, %v940
        %942 = vmatprep.mubr.f32.mxu0 0.0
        %943 = vmatmul.mubr.f32.gmra.mrb[0].mxu0 %v307
        %v944 = vpop.f32.mrb[0].mxu0
        %v945 = vadd.f32 %v859, %v944
        %v946 = vpop.f32.mrb[0].mxu0
        %v947 = vadd.f32 %v863, %v946
        %948 = vmatprep.mubr.f32.mxu0 0.0
        %949 = vmatmul.mubr.f32.gmra.mrb[0].mxu0 %v308
        %v950 = vpop.f32.mrb[0].mxu0
        %v951 = vadd.f32 %v859, %v950
        %v952 = vpop.f32.mrb[0].mxu0
        %v953 = vadd.f32 %v863, %v952
        %954 = vmatprep.mubr.f32.mxu0 0.0
        %955 = vmatmul.mubr.f32.gmra.mrb[0].mxu0 %v309
        %v956 = vpop.f32.mrb[0].mxu0
        %v957 = vadd.f32 %v859, %v956
        %v958 = vpop.f32.mrb[0].mxu0
        %v959 = vadd.f32 %v863, %v958
        %960 = vmatprep.mubr.f32.mxu0 0.0
        %961 = vmatmul.mubr.f32.gmra.mrb[0].mxu0 %v310
        %v962 = vpop.f32.mrb[0].mxu0
        %v963 = vadd.f32 %v859, %v962
        %v964 = vpop.f32.mrb[0].mxu0
        %v965 = vadd.f32 %v863, %v964
        %966 = vmatprep.mubr.f32.mxu0 0.0
        %967 = vmatmul.mubr.f32.gmra.mrb[0].mxu0 %v311
        %v968 = vpop.f32.mrb[0].mxu0
        %v969 = vadd.f32 %v859, %v968
        %v970 = vpop.f32.mrb[0].mxu0
        %v971 = vadd.f32 %v863, %v970
        %972 = vmatprep.mubr.f32.mxu0 0.0
        %973 = vmatmul.mubr.f32.gmra.mrb[0].mxu0 %v312
        %v974 = vpop.f32.mrb[0].mxu0
        %v975 = vadd.f32 %v859, %v974
        %v976 = vpop.f32.mrb[0].mxu0
        %v977 = vadd.f32 %v863, %v976
        %978 = vdwg.mxu0
        %v979 = vmul.f32 %v933, %v933
        %v980 = vmul.f32 %v935, %v935
        %v981 = vmul.f32 %v939, %v939
        %v982 = vmul.f32 %v941, %v941
        %v983 = vmul.f32 %v945, %v945
        %v984 = vmul.f32 %v947, %v947
        %v985 = vmul.f32 %v951, %v951
        %v986 = vmul.f32 %v953, %v953
        %v987 = vmul.f32 %v957, %v957
        %v988 = vmul.f32 %v959, %v959
        %v989 = vmul.f32 %v963, %v963
        %v990 = vmul.f32 %v965, %v965
        %v991 = vmul.f32 %v969, %v969
        %v992 = vmul.f32 %v971, %v971
        %v993 = vmul.f32 %v975, %v975
        %v994 = vmul.f32 %v977, %v977
        %v995 = vmul.f32 %v933, %v979
        %v996 = vmul.f32 %v935, %v980
        %v997 = vmul.f32 %v939, %v981
        %v998 = vmul.f32 %v941, %v982
        %v999 = vmul.f32 %v945, %v983
        %v1000 = vmul.f32 %v947, %v984
        %v1001 = vmul.f32 %v951, %v985
        %v1002 = vmul.f32 %v953, %v986
        %v1003 = vmul.f32 %v957, %v987
        %v1004 = vmul.f32 %v959, %v988
        %v1005 = vmul.f32 %v963, %v989
        %v1006 = vmul.f32 %v965, %v990
        %v1007 = vmul.f32 %v969, %v991
        %v1008 = vmul.f32 %v971, %v992
        %v1009 = vmul.f32 %v975, %v993
        %v1010 = vmul.f32 %v977, %v994
        %v1011 = vmul.f32 %v995, 0.044715
        %v1012 = vmul.f32 %v996, 0.044715
        %v1013 = vmul.f32 %v997, 0.044715
        %v1014 = vmul.f32 %v998, 0.044715
        %v1015 = vmul.f32 %v999, 0.044715
        %v1016 = vmul.f32 %v1000, 0.044715
        %v1017 = vmul.f32 %v1001, 0.044715
        %v1018 = vmul.f32 %v1002, 0.044715
        %v1019 = vmul.f32 %v1003, 0.044715
        %v1020 = vmul.f32 %v1004, 0.044715
        %v1021 = vmul.f32 %v1005, 0.044715
        %v1022 = vmul.f32 %v1006, 0.044715
        %v1023 = vmul.f32 %v1007, 0.044715
        %v1024 = vmul.f32 %v1008, 0.044715
        %v1025 = vmul.f32 %v1009, 0.044715
        %v1026 = vmul.f32 %v1010, 0.044715
        %v1027 = vadd.f32 %v933, %v1011
        %v1028 = vadd.f32 %v935, %v1012
        %v1029 = vadd.f32 %v939, %v1013
        %v1030 = vadd.f32 %v941, %v1014
        %v1031 = vadd.f32 %v945, %v1015
        %v1032 = vadd.f32 %v947, %v1016
        %v1033 = vadd.f32 %v951, %v1017
        %v1034 = vadd.f32 %v953, %v1018
        %v1035 = vadd.f32 %v957, %v1019
        %v1036 = vadd.f32 %v959, %v1020
        %v1037 = vadd.f32 %v963, %v1021
        %v1038 = vadd.f32 %v965, %v1022
        %v1039 = vadd.f32 %v969, %v1023
        %v1040 = vadd.f32 %v971, %v1024
        %v1041 = vadd.f32 %v975, %v1025
        %v1042 = vadd.f32 %v977, %v1026
        %v1043 = vmul.f32 %v1027, 0.7978846
        %v1044 = vmul.f32 %v1028, 0.7978846
        %v1045 = vmul.f32 %v1029, 0.7978846
        %v1046 = vmul.f32 %v1030, 0.7978846
        %v1047 = vmul.f32 %v1031, 0.7978846
        %v1048 = vmul.f32 %v1032, 0.7978846
        %v1049 = vmul.f32 %v1033, 0.7978846
        %v1050 = vmul.f32 %v1034, 0.7978846
        %v1051 = vmul.f32 %v1035, 0.7978846
        %v1052 = vmul.f32 %v1036, 0.7978846
        %v1053 = vmul.f32 %v1037, 0.7978846
        %v1054 = vmul.f32 %v1038, 0.7978846
        %v1055 = vmul.f32 %v1039, 0.7978846
        %v1056 = vmul.f32 %v1040, 0.7978846
        %v1057 = vmul.f32 %v1041, 0.7978846
        %v1058 = vmul.f32 %v1042, 0.7978846
        %v1059 = vtanh.pop %v1043
        %v1060 = vtanh.pop %v1044
        %v1061 = vtanh.pop %v1045
        %v1062 = vtanh.pop %v1046
        %v1063 = vtanh.pop %v1047
        %v1064 = vtanh.pop %v1048
        %v1065 = vtanh.pop %v1049
        %v1066 = vtanh.pop %v1050
        %v1067 = vtanh.pop %v1051
        %v1068 = vtanh.pop %v1052
        %v1069 = vtanh.pop %v1053
        %v1070 = vtanh.pop %v1054
        %v1071 = vtanh.pop %v1055
        %v1072 = vtanh.pop %v1056
        %v1073 = vtanh.pop %v1057
        %v1074 = vtanh.pop %v1058
        %v1075 = vadd.f32 %v1059, 1.0
        %v1076 = vadd.f32 %v1060, 1.0
        %v1077 = vadd.f32 %v1061, 1.0
        %v1078 = vadd.f32 %v1062, 1.0
        %v1079 = vadd.f32 %v1063, 1.0
        %v1080 = vadd.f32 %v1064, 1.0
        %v1081 = vadd.f32 %v1065, 1.0
        %v1082 = vadd.f32 %v1066, 1.0
        %v1083 = vadd.f32 %v1067, 1.0
        %v1084 = vadd.f32 %v1068, 1.0
        %v1085 = vadd.f32 %v1069, 1.0
        %v1086 = vadd.f32 %v1070, 1.0
        %v1087 = vadd.f32 %v1071, 1.0
        %v1088 = vadd.f32 %v1072, 1.0
        %v1089 = vadd.f32 %v1073, 1.0
        %v1090 = vadd.f32 %v1074, 1.0
        %v1091 = vmul.f32 %v1075, 0.5
        %v1092 = vmul.f32 %v1076, 0.5
        %v1093 = vmul.f32 %v1077, 0.5
        %v1094 = vmul.f32 %v1078, 0.5
        %v1095 = vmul.f32 %v1079, 0.5
        %v1096 = vmul.f32 %v1080, 0.5
        %v1097 = vmul.f32 %v1081, 0.5
        %v1098 = vmul.f32 %v1082, 0.5
        %v1099 = vmul.f32 %v1083, 0.5
        %v1100 = vmul.f32 %v1084, 0.5
        %v1101 = vmul.f32 %v1085, 0.5
        %v1102 = vmul.f32 %v1086, 0.5
        %v1103 = vmul.f32 %v1087, 0.5
        %v1104 = vmul.f32 %v1088, 0.5
        %v1105 = vmul.f32 %v1089, 0.5
        %v1106 = vmul.f32 %v1090, 0.5
        %v1107 = vmul.f32 %v933, %v1091
        %v1108 = vmul.f32 %v935, %v1092
        %v1109 = vmul.f32 %v939, %v1093
        %v1110 = vmul.f32 %v941, %v1094
        %v1111 = vmul.f32 %v945, %v1095
        %v1112 = vmul.f32 %v947, %v1096
        %v1113 = vmul.f32 %v951, %v1097
        %v1114 = vmul.f32 %v953, %v1098
        %v1115 = vmul.f32 %v957, %v1099
        %v1116 = vmul.f32 %v959, %v1100
        %v1117 = vmul.f32 %v963, %v1101
        %v1118 = vmul.f32 %v965, %v1102
        %v1119 = vmul.f32 %v969, %v1103
        %v1120 = vmul.f32 %v971, %v1104
        %v1121 = vmul.f32 %v975, %v1105
        %v1122 = vmul.f32 %v977, %v1106
        %s1123 = scalar_lea.vmem [#allocation5], 256
        %v1124 = vld [vmem:[%s1123] sm:$0xff]
        %v1125 = vld [vmem:[%s1123 + $0x8] sm:$0xff]
        %v1126 = vld [vmem:[%s1123 + $0x10] sm:$0xff]
        %v1127 = vld [vmem:[%s1123 + $0x18] sm:$0xff]
        %v1128 = vld [vmem:[%s1123 + $0x20] sm:$0xff]
        %v1129 = vld [vmem:[%s1123 + $0x28] sm:$0xff]
        %v1130 = vld [vmem:[%s1123 + $0x30] sm:$0xff]
        %v1131 = vld [vmem:[%s1123 + $0x38] sm:$0xff]
        %v1132 = vld [vmem:[%s1123 + $0x40] sm:$0xff]
        %v1133 = vld [vmem:[%s1123 + $0x48] sm:$0xff]
        %v1134 = vld [vmem:[%s1123 + $0x50] sm:$0xff]
        %v1135 = vld [vmem:[%s1123 + $0x58] sm:$0xff]
        %v1136 = vld [vmem:[%s1123 + $0x60] sm:$0xff]
        %v1137 = vld [vmem:[%s1123 + $0x68] sm:$0xff]
        %v1138 = vld [vmem:[%s1123 + $0x70] sm:$0xff]
        %v1139 = vld [vmem:[%s1123 + $0x78] sm:$0xff]
        %v1140 = vld [vmem:[%s1123 + $0x80] sm:$0xff]
        %v1141 = vld [vmem:[%s1123 + $0x88] sm:$0xff]
        %v1142 = vld [vmem:[%s1123 + $0x90] sm:$0xff]
        %v1143 = vld [vmem:[%s1123 + $0x98] sm:$0xff]
        %v1144 = vld [vmem:[%s1123 + $0xa0] sm:$0xff]
        %v1145 = vld [vmem:[%s1123 + $0xa8] sm:$0xff]
        %v1146 = vld [vmem:[%s1123 + $0xb0] sm:$0xff]
        %v1147 = vld [vmem:[%s1123 + $0xb8] sm:$0xff]
        %v1148 = vld [vmem:[%s1123 + $0xc0] sm:$0xff]
        %v1149 = vld [vmem:[%s1123 + $0xc8] sm:$0xff]
        %v1150 = vld [vmem:[%s1123 + $0xd0] sm:$0xff]
        %v1151 = vld [vmem:[%s1123 + $0xd8] sm:$0xff]
        %v1152 = vld [vmem:[%s1123 + $0xe0] sm:$0xff]
        %v1153 = vld [vmem:[%s1123 + $0xe8] sm:$0xff]
        %v1154 = vld [vmem:[%s1123 + $0xf0] sm:$0xff]
        %v1155 = vld [vmem:[%s1123 + $0xf8] sm:$0xff]
        %v1156 = vld [vmem:[%s5 + $0x1] sm:$0x1]
        %v1157 = vlaneseq
        %v1158 = vshrl.u32 %v1157, 7
        %v1159 = vsub.s32 0, %v1158
        %v1160 = vrot.slane %v1156, %v1159
        %1161 = vmatprep.subr.mxu0 0.0
        %1162 = vmatpush1.msra.mxu0 %v1124
        %1163 = vmatprep.subr.mxu0 0.0
        %1164 = vmatpush1.msra.mxu0 %v1125
        %1165 = vmatprep.subr.mxu0 0.0
        %1166 = vmatpush1.msra.mxu0 %v1126
        %1167 = vmatprep.subr.mxu0 0.0
        %1168 = vmatpush1.msra.mxu0 %v1127
        %1169 = vmatprep.subr.mxu0 0.0
        %1170 = vmatpush1.msra.mxu0 %v1128
        %1171 = vmatprep.subr.mxu0 0.0
        %1172 = vmatpush1.msra.mxu0 %v1129
        %1173 = vmatprep.subr.mxu0 0.0
        %1174 = vmatpush1.msra.mxu0 %v1130
        %1175 = vmatprep.subr.mxu0 0.0
        %1176 = vmatpush1.msra.mxu0 %v1131
        %1177 = vmatprep.subr.mxu0 0.0
        %1178 = vmatpush1.msra.mxu0 %v1132
        %1179 = vmatprep.subr.mxu0 0.0
        %1180 = vmatpush1.msra.mxu0 %v1133
        %1181 = vmatprep.subr.mxu0 0.0
        %1182 = vmatpush1.msra.mxu0 %v1134
        %1183 = vmatprep.subr.mxu0 0.0
        %1184 = vmatpush1.msra.mxu0 %v1135
        %1185 = vmatprep.subr.mxu0 0.0
        %1186 = vmatpush1.msra.mxu0 %v1136
        %1187 = vmatprep.subr.mxu0 0.0
        %1188 = vmatpush1.msra.mxu0 %v1137
        %1189 = vmatprep.subr.mxu0 0.0
        %1190 = vmatpush1.msra.mxu0 %v1138
        %1191 = vmatprep.subr.mxu0 0.0
        %1192 = vmatpush1.msra.mxu0 %v1139
        %1193 = vmatprep.subr.mxu0 0.0
        %1194 = vmatpush1.msra.mxu0 %v1140
        %1195 = vmatprep.subr.mxu0 0.0
        %1196 = vmatpush1.msra.mxu0 %v1141
        %1197 = vmatprep.subr.mxu0 0.0
        %1198 = vmatpush1.msra.mxu0 %v1142
        %1199 = vmatprep.subr.mxu0 0.0
        %1200 = vmatpush1.msra.mxu0 %v1143
        %1201 = vmatprep.subr.mxu0 0.0
        %1202 = vmatpush1.msra.mxu0 %v1144
        %1203 = vmatprep.subr.mxu0 0.0
        %1204 = vmatpush1.msra.mxu0 %v1145
        %1205 = vmatprep.subr.mxu0 0.0
        %1206 = vmatpush1.msra.mxu0 %v1146
        %1207 = vmatprep.subr.mxu0 0.0
        %1208 = vmatpush1.msra.mxu0 %v1147
        %1209 = vmatprep.subr.mxu0 0.0
        %1210 = vmatpush1.msra.mxu0 %v1148
        %1211 = vmatprep.subr.mxu0 0.0
        %1212 = vmatpush1.msra.mxu0 %v1149
        %1213 = vmatprep.subr.mxu0 0.0
        %1214 = vmatpush1.msra.mxu0 %v1150
        %1215 = vmatprep.subr.mxu0 0.0
        %1216 = vmatpush1.msra.mxu0 %v1151
        %1217 = vmatprep.subr.mxu0 0.0
        %1218 = vmatpush1.msra.mxu0 %v1152
        %1219 = vmatprep.subr.mxu0 0.0
        %1220 = vmatpush1.msra.mxu0 %v1153
        %1221 = vmatprep.subr.mxu0 0.0
        %1222 = vmatpush1.msra.mxu0 %v1154
        %1223 = vmatprep.subr.mxu0 0.0
        %1224 = vmatpush1.msra.mxu0 %v1155
        %1225 = vmatprep.mubr.f32.mxu0 %v1108
        %1226 = vmatmul.mubr.f32.gmra.mrb[0].mxu0 %v1107
        %v1227 = vpop.f32.mrb[0].mxu0
        %v1228 = vadd.f32 %v1160, %v1227
        %v1229 = vpop.f32.mrb[0].mxu0
        %1230 = vmatprep.mubr.f32.mxu0 %v1110
        %1231 = vmatmul.mubr.f32.gmra.mrb[0].mxu0 %v1109
        %v1232 = vpop.f32.mrb[0].mxu0
        %v1233 = vadd.f32 %v1160, %v1232
        %v1234 = vpop.f32.mrb[0].mxu0
        %1235 = vmatprep.mubr.f32.mxu0 %v1112
        %1236 = vmatmul.mubr.f32.gmra.mrb[0].mxu0 %v1111
        %v1237 = vpop.f32.mrb[0].mxu0
        %v1238 = vadd.f32 %v1160, %v1237
        %v1239 = vpop.f32.mrb[0].mxu0
        %1240 = vmatprep.mubr.f32.mxu0 %v1114
        %1241 = vmatmul.mubr.f32.gmra.mrb[0].mxu0 %v1113
        %v1242 = vpop.f32.mrb[0].mxu0
        %v1243 = vadd.f32 %v1160, %v1242
        %v1244 = vpop.f32.mrb[0].mxu0
        %1245 = vmatprep.mubr.f32.mxu0 %v1116
        %1246 = vmatmul.mubr.f32.gmra.mrb[0].mxu0 %v1115
        %v1247 = vpop.f32.mrb[0].mxu0
        %v1248 = vadd.f32 %v1160, %v1247
        %v1249 = vpop.f32.mrb[0].mxu0
        %1250 = vmatprep.mubr.f32.mxu0 %v1118
        %1251 = vmatmul.mubr.f32.gmra.mrb[0].mxu0 %v1117
        %v1252 = vpop.f32.mrb[0].mxu0
        %v1253 = vadd.f32 %v1160, %v1252
        %v1254 = vpop.f32.mrb[0].mxu0
        %1255 = vmatprep.mubr.f32.mxu0 %v1120
        %1256 = vmatmul.mubr.f32.gmra.mrb[0].mxu0 %v1119
        %v1257 = vpop.f32.mrb[0].mxu0
        %v1258 = vadd.f32 %v1160, %v1257
        %v1259 = vpop.f32.mrb[0].mxu0
        %1260 = vmatprep.mubr.f32.mxu0 %v1122
        %1261 = vmatmul.mubr.f32.gmra.mrb[0].mxu0 %v1121
        %v1262 = vpop.f32.mrb[0].mxu0
        %v1263 = vadd.f32 %v1160, %v1262
        %v1264 = vpop.f32.mrb[0].mxu0
        %1265 = vdwg.mxu0
        %1266 = vset.pattern.permute.xlu0 1
        %1267 = vperm.xlu0 %1266, %v756
        %v1268 = vpop.permute.xlu0 %1267
        %1270 = vset.pattern.permute.xlu0 1
        %1271 = vperm.xlu0 %1270, %v757
        %v1272 = vpop.permute.xlu0 %1271
        %1274 = vset.pattern.permute.xlu0 1
        %1275 = vperm.xlu0 %1274, %v758
        %v1276 = vpop.permute.xlu0 %1275
        %1278 = vset.pattern.permute.xlu0 1
        %1279 = vperm.xlu0 %1278, %v759
        %v1280 = vpop.permute.xlu0 %1279
        %1282 = vset.pattern.permute.xlu0 1
        %1283 = vperm.xlu0 %1282, %v760
        %v1284 = vpop.permute.xlu0 %1283
        %1286 = vset.pattern.permute.xlu0 1
        %1287 = vperm.xlu0 %1286, %v761
        %v1288 = vpop.permute.xlu0 %1287
        %1290 = vset.pattern.permute.xlu0 1
        %1291 = vperm.xlu0 %1290, %v762
        %v1292 = vpop.permute.xlu0 %1291
        %1294 = vset.pattern.permute.xlu0 1
        %1295 = vperm.xlu0 %1294, %v763
        %v1296 = vpop.permute.xlu0 %1295
        %v1298 = vmul.f32 %v1268, %v1228
        %v1299 = vmul.f32 %v1272, %v1233
        %v1300 = vmul.f32 %v1276, %v1238
        %v1301 = vmul.f32 %v1280, %v1243
        %v1302 = vmul.f32 %v1284, %v1248
        %v1303 = vmul.f32 %v1288, %v1253
        %v1304 = vmul.f32 %v1292, %v1258
        %v1305 = vmul.f32 %v1296, %v1263
        %v1306 = vadd.f32 %v812, %v1298
        %v1307 = vadd.f32 %v813, %v1299
        %v1308 = vadd.f32 %v814, %v1300
        %v1309 = vadd.f32 %v815, %v1301
        %v1310 = vadd.f32 %v816, %v1302
        %v1311 = vadd.f32 %v817, %v1303
        %v1312 = vadd.f32 %v818, %v1304
        %v1313 = vadd.f32 %v819, %v1305
        %1314 = vst [vmem:[%s291] sm:$0xff] %v1306
        %1315 = vst [vmem:[%s291 + $0x8] sm:$0xff] %v1307
        %1316 = vst [vmem:[%s291 + $0x10] sm:$0xff] %v1308
        %1317 = vst [vmem:[%s291 + $0x18] sm:$0xff] %v1309
        %1318 = vst [vmem:[%s291 + $0x20] sm:$0xff] %v1310
        %1319 = vst [vmem:[%s291 + $0x28] sm:$0xff] %v1311
        %1320 = vst [vmem:[%s291 + $0x30] sm:$0xff] %v1312
        %1321 = vst [vmem:[%s291 + $0x38] sm:$0xff] %v1313
        %s1322 = sand.u32 %s166, 1
        %s1323 = scalar_lea.sflag [#allocation4], %s1322
        %s1324 = sand.u32 %s166, 1
        %s1325 = smul.addr %s1324, 64
        %s1326 = scalar_lea.vmem [#allocation7], %s1325
        // Predicated region
        $region53: #{tpu_custom_call.1} parent=43 // pred_check
          %p1327 = pneg %p176
        $region54: #{tpu_custom_call.1} parent=43 // pred_check_branch
          %1329 = sbr.rel (%p1327) target = $region56
        $region55: #{tpu_custom_call.1} parent=43 // pred_region
          %s1330 = smul.u32 8, %s22
          %s1332 = ssub.s32 1024, 1024
          %1333 = vsyncadd %s1323, %s1332
          %s1334 = smul.addr %s1330, 128
          %s1335 = scalar_lea.hbm %s6, %s1334
          %s1336 = sshll.u32 %s1326, 4
          %s1337 = int_to_ptr.vmem [resolvable:$true] %s1336
          %1342 = dma.vmem_to_hbm [thread:$0]  %s1337, 1024, %s1335, %s1323, 128, 128, 8
        $region56: #{tpu_custom_call.1} parent=43 // pred_fallthru
          _
      $region44: #{tpu_custom_call.1} parent=5 // pred_fallthru
        _
      %p1343 = scmp.le.s32.totalorder 2, %s17
      // Predicated region
      $region57: #{tpu_custom_call.1} parent=5 // pred_check
        %p1344 = pneg %p1343
      $region58: #{tpu_custom_call.1} parent=5 // pred_check_branch
        %1346 = sbr.rel (%p1344) target = $region60
      $region59: #{tpu_custom_call.1} parent=5 // pred_region
        %s1347 = ssub.s32 %s17, 2
        // Predicated region
        $region61: #{tpu_custom_call.1} parent=59 // pred_check
          %p1348 = pneg %p182
        $region62: #{tpu_custom_call.1} parent=59 // pred_check_branch
          %1350 = sbr.rel (%p1348) target = $region64
        $region63: #{tpu_custom_call.1} parent=59 // pred_region
          %s1351 = sand.u32 %s167, 1
          %s1352 = scalar_lea.sflag [#allocation4], %s1351
          %s1353 = sand.u32 %s167, 1
          %s1354 = smul.addr %s1353, 64
          %s1355 = scalar_lea.vmem [#allocation7], %s1354
          %1356 = dma.done %s1352, 1024
        $region64: #{tpu_custom_call.1} parent=59 // pred_fallthru
          _
      $region60: #{tpu_custom_call.1} parent=5 // pred_fallthru
        _
    $region6: #{tpu_custom_call.1} parent=1 // loop_footer
      %s21 = sadd.s32 1, %s17
    $region7: #{tpu_custom_call.1} parent=1 // loop_footer_branch
      %16 = sbr.rel target = $region3
    $region8: #{tpu_custom_call.1} parent=1 // loop_exit
      _
    %1357 = vsyncpa [#allocation3], 1
    %s1358 = scalar_lea.sflag [#allocation3], 1
    %1359 = vsyncpa %s1358, 1
    %1360 = vsyncpa [#allocation6], 1
    %1361 = vsyncpa [#allocation4], 1
    %s1362 = scalar_lea.sflag [#allocation4], 1
    %1363 = vsyncpa %s1362, 1

</llo_original>
